<compile_context>
chip_gen: v7x
topology: tpu7x:2x2x1
jax: 0.10.0
libtpu: 0.0.40
codegen_flags: <defaults>
</compile_context>

<pallas_src>
import functools
import math

import jax
import jax.numpy as jnp
from jax.experimental import pallas as pl
from jax.experimental.pallas import tpu as pltpu


def _attention_kernel(x_ref, w_q_ref, w_kv_ref, b_q_ref, b_kv_ref,
                      w_proj_ref, b_proj_ref,
                      out_ref, present_ref,
                      kh_ref, vh_ref, m_ref, l_ref, acc_ref,
                      *, n_head, head_dim, tq, compute_dtype, exp_dtype):
    """Grid = (batch, query_block).

    x_ref:       (S, H)            VMEM (batch squeezed; resident across qi)
    w_q_ref:     (H, H)            VMEM, compute_dtype
    w_kv_ref:    (H, 2H)           VMEM, compute_dtype
    b_q_ref:     (1, H)            VMEM, f32
    b_kv_ref:    (1, 2H)           VMEM, f32
    w_proj_ref:  (H, H)            VMEM, compute_dtype
    b_proj_ref:  (1, H)            VMEM, f32
    out_ref:     (tq, H)           VMEM (one query block)
    present_ref: (2, S, H)         VMEM, lane-dense k/v slabs (resident across qi)
    kh_ref/vh_ref: (n_head, S, d)  VMEM scratch, compute_dtype (head-split K/V cache)
    m_ref/l_ref: (n_head, tq, 1)   VMEM scratch, f32 (online-softmax stats)
    acc_ref:     (n_head, tq, d)   VMEM scratch, f32 (PV accumulator)
    """
    S, H = x_ref.shape
    qi = pl.program_id(1)
    tkv = tq  # kv block size == query block size

    # --- K/V projection + head-split cache: once per batch element.
    @pl.when(qi == 0)
    def _():
        x = x_ref[...].astype(compute_dtype)
        kv = jnp.dot(x, w_kv_ref[...], preferred_element_type=jnp.float32)
        kv = kv + b_kv_ref[...]                               # [S, 2H] f32
        k = kv[:, :H]
        v = kv[:, H:]
        present_ref[0] = k                                    # k slab [S, H]
        present_ref[1] = v                                    # v slab [S, H]
        kh_ref[...] = jnp.transpose(
            k.reshape(S, n_head, head_dim), (1, 0, 2)).astype(compute_dtype)
        vh_ref[...] = jnp.transpose(
            v.reshape(S, n_head, head_dim), (1, 0, 2)).astype(compute_dtype)

    # --- Q projection for this query block only; fold 1/sqrt(d) into q.
    q_start = pl.multiple_of(qi * tq, tq)
    x_q = x_ref[pl.ds(q_start, tq), :].astype(compute_dtype)     # [tq, H]
    q = jnp.dot(x_q, w_q_ref[...], preferred_element_type=jnp.float32)
    q = (q + b_q_ref[...]) * (1.0 / math.sqrt(head_dim))         # [tq, H] f32
    qh = jnp.transpose(q.reshape(tq, n_head, head_dim),
                       (1, 0, 2)).astype(compute_dtype)          # [h, tq, d]

    # --- Online (flash-style) softmax over causal kv blocks.
    m_ref[...] = jnp.full_like(m_ref, -jnp.inf)
    l_ref[...] = jnp.zeros_like(l_ref)
    acc_ref[...] = jnp.zeros_like(acc_ref)

    def kv_step(j, carry):
        kv_start = pl.multiple_of(j * tkv, tkv)
        k_blk = kh_ref[:, pl.ds(kv_start, tkv), :]               # [h, tkv, d]
        v_blk = vh_ref[:, pl.ds(kv_start, tkv), :]               # [h, tkv, d]

        # head-batched scores, f32 accumulation: [h, tq, tkv]
        s = jnp.einsum('hqd,hkd->hqk', qh, k_blk,
                       preferred_element_type=jnp.float32)

        # causal mask via iota compare (only the diagonal block is affected).
        row = q_start + jax.lax.broadcasted_iota(jnp.int32, (1, tq, tkv), 1)
        col = kv_start + jax.lax.broadcasted_iota(jnp.int32, (1, tq, tkv), 2)
        s = jnp.where(row >= col, s, jnp.float32(-1e10))

        m_prev = m_ref[...]
        m_new = jnp.maximum(m_prev, jnp.max(s, axis=-1, keepdims=True))
        alpha = jnp.exp(m_prev - m_new)                          # f32, tiny count
        p = jnp.exp((s - m_new).astype(exp_dtype))               # bf16 EUP on v6e/v7x
        l_ref[...] = alpha * l_ref[...] + jnp.sum(
            p.astype(jnp.float32), axis=-1, keepdims=True)
        pv = jnp.einsum('hqk,hkd->hqd', p.astype(compute_dtype), v_blk,
                        preferred_element_type=jnp.float32)
        acc_ref[...] = alpha * acc_ref[...] + pv
        m_ref[...] = m_new
        return carry

    # Only kv blocks at or below the diagonal (skip fully-masked blocks).
    jax.lax.fori_loop(0, qi + 1, kv_step, 0)

    # Normalize (EUP reciprocal), merge heads, output projection.
    a = acc_ref[...] * pl.reciprocal(l_ref[...], approx=True)    # [h, tq, d] f32
    a = jnp.transpose(a, (1, 0, 2)).reshape(tq, H)               # [tq, H]
    out = jnp.dot(a.astype(compute_dtype), w_proj_ref[...],
                  preferred_element_type=jnp.float32)
    out_ref[...] = (out + b_proj_ref[...]).astype(out_ref.dtype)


def _tpu_device_kind():
    try:
        return jax.devices()[0].device_kind.lower()
    except Exception:
        return ""


def _pick_query_block(S, max_tq):
    for cand in (256, 128, 64, 32, 16, 8):
        if cand <= max_tq and S % cand == 0:
            return cand
    return S  # odd S: single full-extent query block (legal, no qi pipelining)


def attention_forward(x, w_attn, b_attn, w_proj, b_proj, n_head,
                      compute_dtype=jnp.bfloat16, exp_dtype=None):
    """x: [B, S, H]. Weights stored as [in, out] (kernel computes x @ W + b).

    Returns (out [B, S, H], present [B, 2, n_head, S, head_dim]), both x.dtype.
    compute_dtype=bfloat16 (default) uses the bf16 MXU on all generations with
    f32 accumulation; pass compute_dtype=jnp.float32 for bit-accurate matmuls.
    """
    B, S, H = x.shape
    assert H % n_head == 0
    head_dim = H // n_head

    kind = _tpu_device_kind()
    is_v7 = "v7" in kind
    is_v5 = "v5" in kind

    # Generation-dependent tiling / VMEM budget (v7x TC has only 64 MiB).
    max_tq = 128 if is_v7 else 256
    tq = _pick_query_block(S, max_tq)
    nq = S // tq
    vmem_limit = (56 if is_v7 else 100) * 1024 * 1024

    if exp_dtype is None:
        bf16_compute = jnp.dtype(compute_dtype) == jnp.dtype(jnp.bfloat16)
        exp_dtype = jnp.bfloat16 if (bf16_compute and not is_v5) else jnp.float32

    # Hoisted weight casts / splits (no per-step VPU casts, no in-kernel
    # lane slicing of the fused QKV weight).
    w_q = w_attn[:, :H].astype(compute_dtype)
    w_kv = w_attn[:, H:].astype(compute_dtype)
    w_proj_c = w_proj.astype(compute_dtype)
    b_q = b_attn[:H].reshape(1, H).astype(jnp.float32)
    b_kv = b_attn[H:].reshape(1, 2 * H).astype(jnp.float32)
    b_proj2 = b_proj.reshape(1, H).astype(jnp.float32)

    kernel = functools.partial(_attention_kernel, n_head=n_head,
                               head_dim=head_dim, tq=tq,
                               compute_dtype=compute_dtype, exp_dtype=exp_dtype)

    out, present_dense = pl.pallas_call(
        kernel,
        out_shape=(
            jax.ShapeDtypeStruct((B, S, H), x.dtype),
            jax.ShapeDtypeStruct((B, 2, S, H), x.dtype),
        ),
        grid_spec=pltpu.PrefetchScalarGridSpec(
            num_scalar_prefetch=0,
            grid=(B, nq),
            in_specs=[
                pl.BlockSpec((None, S, H), lambda b, qi: (b, 0, 0)),
                pl.BlockSpec((H, H), lambda b, qi: (0, 0)),        # w_q
                pl.BlockSpec((H, 2 * H), lambda b, qi: (0, 0)),    # w_kv
                pl.BlockSpec((1, H), lambda b, qi: (0, 0)),        # b_q
                pl.BlockSpec((1, 2 * H), lambda b, qi: (0, 0)),    # b_kv
                pl.BlockSpec((H, H), lambda b, qi: (0, 0)),        # w_proj
                pl.BlockSpec((1, H), lambda b, qi: (0, 0)),        # b_proj
            ],
            out_specs=[
                pl.BlockSpec((None, tq, H), lambda b, qi: (b, qi, 0)),
                pl.BlockSpec((None, 2, S, H), lambda b, qi: (b, 0, 0, 0)),
            ],
            scratch_shapes=[
                pltpu.VMEM((n_head, S, head_dim), compute_dtype),   # kh cache
                pltpu.VMEM((n_head, S, head_dim), compute_dtype),   # vh cache
                pltpu.VMEM((n_head, tq, 1), jnp.float32),           # m (running max)
                pltpu.VMEM((n_head, tq, 1), jnp.float32),           # l (running sum)
                pltpu.VMEM((n_head, tq, head_dim), jnp.float32),    # PV accumulator
            ],
        ),
        compiler_params=pltpu.CompilerParams(
            # qi must be "arbitrary": qi>0 steps read kh/vh scratch written at
            # qi==0 (single-core residency). Batch axis shards across v7x cores.
            dimension_semantics=("parallel", "arbitrary"),
            vmem_limit_bytes=vmem_limit,
        ),
    )(x, w_q, w_kv, b_q, b_kv, w_proj_c, b_proj2)

    # [B, 2, S, H] -> [B, 2, n_head, S, head_dim]
    # (== torch.stack([k, v], dim=1) of split-head tensors); done outside the
    # kernel so the kernel's stores stay lane-dense.
    present = present_dense.reshape(B, 2, S, n_head, head_dim)
    present = present.transpose(0, 1, 3, 2, 4)
    return out, present


def attention_ref(x, w_attn, b_attn, w_proj, b_proj, n_head):
    """Pure-JAX reference mirroring the PyTorch forward (past=None)."""
    B, S, H = x.shape
    d = H // n_head
    c = x @ w_attn + b_attn
    q, k, v = jnp.split(c, 3, axis=-1)

    def split_heads(t):
        return t.reshape(B, S, n_head, d).transpose(0, 2, 1, 3)

    q, k, v = map(split_heads, (q, k, v))
    present = jnp.stack([k, v], axis=1)
    w = jnp.einsum('bhqd,bhkd->bhqk', q, k) / math.sqrt(d)
    mask = (jnp.arange(S)[:, None] >= jnp.arange(S)[None, :]).astype(x.dtype)
    w = w * mask - 1e10 * (1.0 - mask)
    w = jax.nn.softmax(w, axis=-1)
    a = jnp.einsum('bhqk,bhkd->bhqd', w, v)
    a = a.transpose(0, 2, 1, 3).reshape(B, S, H)
    return a @ w_proj + b_proj, present


if __name__ == "__main__":
    # HParams-like: n_hidden=32, n_head=4, n_ctx >= seq
    B, S, n_hidden, n_head = 2, 8, 32, 4

    key = jax.random.PRNGKey(0)
    kx, kw1, kw2 = jax.random.split(key, 3)

    x = jax.random.normal(kx, (B, S, n_hidden), dtype=jnp.float32)
    # Conv1D.reset_parameters: weight ~ N(0, 0.02), bias = 0.
    w_attn = 0.02 * jax.random.normal(kw1, (n_hidden, 3 * n_hidden), dtype=jnp.float32)
    b_attn = jnp.zeros((3 * n_hidden,), jnp.float32)
    w_proj = 0.02 * jax.random.normal(kw2, (n_hidden, n_hidden), dtype=jnp.float32)
    b_proj = jnp.zeros((n_hidden,), jnp.float32)

    out_r, present_r = attention_ref(x, w_attn, b_attn, w_proj, b_proj, n_head)

    # 1) f32 compute path: tight numerical check (approx reciprocal only).
    out32, present32 = attention_forward(x, w_attn, b_attn, w_proj, b_proj, n_head,
                                         compute_dtype=jnp.float32)
    jax.block_until_ready((out32, present32))
    assert out32.shape == out_r.shape and present32.shape == present_r.shape
    assert jnp.allclose(out32, out_r, atol=1e-3, rtol=1e-3), "f32 output mismatch"
    assert jnp.allclose(present32, present_r, atol=1e-4, rtol=1e-4), "f32 present mismatch"

    # 2) default bf16 MXU path (perf configuration): loose check.
    out_bf, present_bf = attention_forward(x, w_attn, b_attn, w_proj, b_proj, n_head)
    jax.block_until_ready((out_bf, present_bf))
    assert out_bf.shape == out_r.shape and present_bf.shape == present_r.shape
    assert jnp.allclose(out_bf, out_r, atol=2e-2, rtol=2e-2), "bf16 output mismatch"
    assert jnp.allclose(present_bf, present_r, atol=1e-2, rtol=1e-2), "bf16 present mismatch"

    print("KERNEL_OK")
</pallas_src>

<mosaic_0001>
module attributes {stable_mosaic.version = 11 : i64} {
  func.func @_attention_kernel(%arg0: i32, %arg1: i32, %arg2: memref<1x8x32xf32, #tpu.memory_space<vmem>>, %arg3: memref<32x32xf32, #tpu.memory_space<vmem>>, %arg4: memref<32x64xf32, #tpu.memory_space<vmem>>, %arg5: memref<1x32xf32, #tpu.memory_space<vmem>>, %arg6: memref<1x64xf32, #tpu.memory_space<vmem>>, %arg7: memref<32x32xf32, #tpu.memory_space<vmem>>, %arg8: memref<1x32xf32, #tpu.memory_space<vmem>>, %arg9: memref<1x8x32xf32, #tpu.memory_space<vmem>>, %arg10: memref<1x2x8x32xf32, #tpu.memory_space<vmem>>, %arg11: memref<4x8x8xf32, #tpu.memory_space<vmem>>, %arg12: memref<4x8x8xf32, #tpu.memory_space<vmem>>, %arg13: memref<4x8x1xf32, #tpu.memory_space<vmem>>, %arg14: memref<4x8x1xf32, #tpu.memory_space<vmem>>, %arg15: memref<4x8x8xf32, #tpu.memory_space<vmem>>) attributes {dimension_semantics = [#tpu.dimension_semantics<parallel>, #tpu.dimension_semantics<arbitrary>], iteration_bounds = array<i64: 2, 1>, scalar_prefetch = 0 : i64, scratch_operands = 5 : i64, tpu.core_type = #tpu.core_type<tc>, window_params = [{transform_indices = @transform_0, window_bounds = array<i64: 1, 8, 32>}, {pipeline_mode = #tpu.pipeline_mode<synchronous>, transform_indices = @transform_1, window_bounds = array<i64: 32, 32>}, {pipeline_mode = #tpu.pipeline_mode<synchronous>, transform_indices = @transform_2, window_bounds = array<i64: 32, 64>}, {pipeline_mode = #tpu.pipeline_mode<synchronous>, transform_indices = @transform_3, window_bounds = array<i64: 1, 32>}, {pipeline_mode = #tpu.pipeline_mode<synchronous>, transform_indices = @transform_4, window_bounds = array<i64: 1, 64>}, {pipeline_mode = #tpu.pipeline_mode<synchronous>, transform_indices = @transform_5, window_bounds = array<i64: 32, 32>}, {pipeline_mode = #tpu.pipeline_mode<synchronous>, transform_indices = @transform_6, window_bounds = array<i64: 1, 32>}, {transform_indices = @transform_7, window_bounds = array<i64: 1, 8, 32>}, {transform_indices = @transform_8, window_bounds = array<i64: 1, 2, 8, 32>}]} {
    %c0_i32 = arith.constant 0 : i32
    %0 = arith.cmpi eq, %arg1, %c0_i32 : i32
    %1 = arith.extui %0 : i1 to i32
    %c0_i32_0 = arith.constant 0 : i32
    %2 = arith.cmpi ne, %1, %c0_i32_0 : i32
    scf.if %2 {
      %c0_36 = arith.constant 0 : index
      %c0_37 = arith.constant 0 : index
      %c0_38 = arith.constant 0 : index
      %41 = vector.load %arg2[%c0_36, %c0_37, %c0_38] : memref<1x8x32xf32, #tpu.memory_space<vmem>>, vector<1x8x32xf32>
      %42 = vector.shape_cast %41 : vector<1x8x32xf32> to vector<8x32xf32>
      %c0_39 = arith.constant 0 : index
      %c0_40 = arith.constant 0 : index
      %43 = vector.load %arg4[%c0_39, %c0_40] : memref<32x64xf32, #tpu.memory_space<vmem>>, vector<32x64xf32>
      %cst_41 = arith.constant dense<0.000000e+00> : vector<8x64xf32>
      %44 = tpu.matmul %42, %43, %cst_41 {dimension_numbers = #tpu.dot_dimension_numbers<[1], [0], [0], [1], [0, 0, 1, 1], [], []>} : vector<8x32xf32>, vector<32x64xf32>, vector<8x64xf32> -> vector<8x64xf32>
      %c0_42 = arith.constant 0 : index
      %c0_43 = arith.constant 0 : index
      %45 = vector.load %arg6[%c0_42, %c0_43] : memref<1x64xf32, #tpu.memory_space<vmem>>, vector<1x64xf32>
      %46 = vector.broadcast %45 : vector<1x64xf32> to vector<8x64xf32>
      %47 = arith.addf %44, %46 : vector<8x64xf32>
      %48 = vector.extract_strided_slice %47 {offsets = [0, 0], sizes = [8, 32], strides = [1, 1]} : vector<8x64xf32> to vector<8x32xf32>
      %49 = vector.extract_strided_slice %47 {offsets = [0, 32], sizes = [8, 32], strides = [1, 1]} : vector<8x64xf32> to vector<8x32xf32>
      %c0_44 = arith.constant 0 : index
      %c0_45 = arith.constant 0 : index
      %c0_46 = arith.constant 0 : index
      %c0_47 = arith.constant 0 : index
      %50 = vector.load %arg10[%c0_44, %c0_45, %c0_46, %c0_47] : memref<1x2x8x32xf32, #tpu.memory_space<vmem>>, vector<1x1x8x32xf32>
      %51 = vector.shape_cast %50 : vector<1x1x8x32xf32> to vector<8x32xf32>
      %52 = vector.shape_cast %48 : vector<8x32xf32> to vector<1x1x8x32xf32>
      tpu.vector_store %arg10[%c0_44, %c0_45, %c0_46, %c0_47], %52 {strides = array<i32>} : memref<1x2x8x32xf32, #tpu.memory_space<vmem>>, vector<1x1x8x32xf32>,
      %c0_48 = arith.constant 0 : index
      %c1 = arith.constant 1 : index
      %c0_49 = arith.constant 0 : index
      %c0_50 = arith.constant 0 : index
      %53 = vector.load %arg10[%c0_48, %c1, %c0_49, %c0_50] : memref<1x2x8x32xf32, #tpu.memory_space<vmem>>, vector<1x1x8x32xf32>
      %54 = vector.shape_cast %53 : vector<1x1x8x32xf32> to vector<8x32xf32>
      %55 = vector.shape_cast %49 : vector<8x32xf32> to vector<1x1x8x32xf32>
      tpu.vector_store %arg10[%c0_48, %c1, %c0_49, %c0_50], %55 {strides = array<i32>} : memref<1x2x8x32xf32, #tpu.memory_space<vmem>>, vector<1x1x8x32xf32>,
      %56 = vector.shape_cast %48 : vector<8x32xf32> to vector<8x4x8xf32>
      %57 = tpu.transpose %56, [1, 0, 2] : vector<8x4x8xf32> -> vector<4x8x8xf32>
      %c0_51 = arith.constant 0 : index
      %c0_52 = arith.constant 0 : index
      %c0_53 = arith.constant 0 : index
      %58 = vector.load %arg11[%c0_51, %c0_52, %c0_53] : memref<4x8x8xf32, #tpu.memory_space<vmem>>, vector<4x8x8xf32>
      tpu.vector_store %arg11[%c0_51, %c0_52, %c0_53], %57 {strides = array<i32>} : memref<4x8x8xf32, #tpu.memory_space<vmem>>, vector<4x8x8xf32>,
      %59 = vector.shape_cast %49 : vector<8x32xf32> to vector<8x4x8xf32>
      %60 = tpu.transpose %59, [1, 0, 2] : vector<8x4x8xf32> -> vector<4x8x8xf32>
      %c0_54 = arith.constant 0 : index
      %c0_55 = arith.constant 0 : index
      %c0_56 = arith.constant 0 : index
      %61 = vector.load %arg12[%c0_54, %c0_55, %c0_56] : memref<4x8x8xf32, #tpu.memory_space<vmem>>, vector<4x8x8xf32>
      tpu.vector_store %arg12[%c0_54, %c0_55, %c0_56], %60 {strides = array<i32>} : memref<4x8x8xf32, #tpu.memory_space<vmem>>, vector<4x8x8xf32>,
    } else {
    }
    %c8_i32 = arith.constant 8 : i32
    %3 = arith.muli %arg1, %c8_i32 : i32
    %4 = tpu.assume_multiple %3, 8 : i32
    %c0 = arith.constant 0 : index
    %5 = arith.index_cast %4 : i32 to index
    %c0_1 = arith.constant 0 : index
    %6 = vector.load %arg2[%c0, %5, %c0_1] : memref<1x8x32xf32, #tpu.memory_space<vmem>>, vector<1x8x32xf32>
    %7 = vector.shape_cast %6 : vector<1x8x32xf32> to vector<8x32xf32>
    %c0_2 = arith.constant 0 : index
    %c0_3 = arith.constant 0 : index
    %8 = vector.load %arg3[%c0_2, %c0_3] : memref<32x32xf32, #tpu.memory_space<vmem>>, vector<32x32xf32>
    %cst = arith.constant dense<0.000000e+00> : vector<8x32xf32>
    %9 = tpu.matmul %7, %8, %cst {dimension_numbers = #tpu.dot_dimension_numbers<[1], [0], [0], [1], [0, 0, 1, 1], [], []>} : vector<8x32xf32>, vector<32x32xf32>, vector<8x32xf32> -> vector<8x32xf32>
    %c0_4 = arith.constant 0 : index
    %c0_5 = arith.constant 0 : index
    %10 = vector.load %arg5[%c0_4, %c0_5] : memref<1x32xf32, #tpu.memory_space<vmem>>, vector<1x32xf32>
    %11 = vector.broadcast %10 : vector<1x32xf32> to vector<8x32xf32>
    %12 = arith.addf %9, %11 : vector<8x32xf32>
    %cst_6 = arith.constant 0.353553385 : f32
    %13 = vector.broadcast %cst_6 : f32 to vector<8x32xf32>
    %14 = arith.mulf %12, %13 : vector<8x32xf32>
    %15 = vector.shape_cast %14 : vector<8x32xf32> to vector<8x4x8xf32>
    %16 = tpu.transpose %15, [1, 0, 2] : vector<8x4x8xf32> -> vector<4x8x8xf32>
    %cst_7 = arith.constant 0xFF800000 : f32
    %17 = vector.broadcast %cst_7 : f32 to vector<4x8x1xf32>
    %c0_8 = arith.constant 0 : index
    %c0_9 = arith.constant 0 : index
    %c0_10 = arith.constant 0 : index
    %18 = vector.load %arg13[%c0_8, %c0_9, %c0_10] : memref<4x8x1xf32, #tpu.memory_space<vmem>>, vector<4x8x1xf32>
    tpu.vector_store %arg13[%c0_8, %c0_9, %c0_10], %17 {strides = array<i32>} : memref<4x8x1xf32, #tpu.memory_space<vmem>>, vector<4x8x1xf32>,
    %cst_11 = arith.constant 0.000000e+00 : f32
    %19 = vector.broadcast %cst_11 : f32 to vector<4x8x1xf32>
    %c0_12 = arith.constant 0 : index
    %c0_13 = arith.constant 0 : index
    %c0_14 = arith.constant 0 : index
    %20 = vector.load %arg14[%c0_12, %c0_13, %c0_14] : memref<4x8x1xf32, #tpu.memory_space<vmem>>, vector<4x8x1xf32>
    tpu.vector_store %arg14[%c0_12, %c0_13, %c0_14], %19 {strides = array<i32>} : memref<4x8x1xf32, #tpu.memory_space<vmem>>, vector<4x8x1xf32>,
    %cst_15 = arith.constant 0.000000e+00 : f32
    %21 = vector.broadcast %cst_15 : f32 to vector<4x8x8xf32>
    %c0_16 = arith.constant 0 : index
    %c0_17 = arith.constant 0 : index
    %c0_18 = arith.constant 0 : index
    %22 = vector.load %arg15[%c0_16, %c0_17, %c0_18] : memref<4x8x8xf32, #tpu.memory_space<vmem>>, vector<4x8x8xf32>
    tpu.vector_store %arg15[%c0_16, %c0_17, %c0_18], %21 {strides = array<i32>} : memref<4x8x8xf32, #tpu.memory_space<vmem>>, vector<4x8x8xf32>,
    %c1_i32 = arith.constant 1 : i32
    %23 = arith.addi %arg1, %c1_i32 : i32
    %c0_i32_19 = arith.constant 0 : i32
    %c0_i32_20 = arith.constant 0 : i32
    %24 = arith.subi %23, %c0_i32_20 : i32
    %25 = arith.addi %c0_i32_20, %24 : i32
    %c1_i32_21 = arith.constant 1 : i32
    scf.for %arg16 = %c0_i32_20 to %25 step %c1_i32_21  : i32 {
      %c8_i32_36 = arith.constant 8 : i32
      %41 = arith.muli %arg16, %c8_i32_36 : i32
      %42 = tpu.assume_multiple %41, 8 : i32
      %c0_37 = arith.constant 0 : index
      %43 = arith.index_cast %42 : i32 to index
      %c0_38 = arith.constant 0 : index
      %44 = vector.load %arg11[%c0_37, %43, %c0_38] : memref<4x8x8xf32, #tpu.memory_space<vmem>>, vector<4x8x8xf32>
      %c0_39 = arith.constant 0 : index
      %45 = arith.index_cast %42 : i32 to index
      %c0_40 = arith.constant 0 : index
      %46 = vector.load %arg12[%c0_39, %45, %c0_40] : memref<4x8x8xf32, #tpu.memory_space<vmem>>, vector<4x8x8xf32>
      "tpu.trace_start"() <{level = 10 : i32, message = "hqd,hkd->hqk"}> : () -> ()
      %cst_41 = arith.constant dense<0.000000e+00> : vector<4x8x8xf32>
      %47 = tpu.matmul %16, %44, %cst_41 {dimension_numbers = #tpu.dot_dimension_numbers<[2], [2], [1], [1], [0, 0, 0, 1, 1, 1], [0], [0]>} : vector<4x8x8xf32>, vector<4x8x8xf32>, vector<4x8x8xf32> -> vector<4x8x8xf32>
      "tpu.trace_stop"() : () -> ()
      %48 = tpu.iota {dimensions = array<i32: 1>} : vector<1x8x8xi32>
      %49 = vector.broadcast %4 : i32 to vector<1x8x8xi32>
      %50 = arith.addi %49, %48 : vector<1x8x8xi32>
      %51 = tpu.iota {dimensions = array<i32: 2>} : vector<1x8x8xi32>
      %52 = vector.broadcast %42 : i32 to vector<1x8x8xi32>
      %53 = arith.addi %52, %51 : vector<1x8x8xi32>
      %54 = arith.cmpi sge, %50, %53 : vector<1x8x8xi32>
      %cst_42 = arith.constant -1.000000e+10 : f32
      %55 = vector.shape_cast %54 : vector<1x8x8xi1> to vector<1x8x8xi1>
      %56 = vector.broadcast %55 : vector<1x8x8xi1> to vector<4x8x8xi1>
      %57 = vector.broadcast %cst_42 : f32 to vector<4x8x8xf32>
      %58 = arith.select %56, %47, %57 : vector<4x8x8xi1>, vector<4x8x8xf32>
      %c0_43 = arith.constant 0 : index
      %c0_44 = arith.constant 0 : index
      %c0_45 = arith.constant 0 : index
      %59 = vector.load %arg13[%c0_43, %c0_44, %c0_45] : memref<4x8x1xf32, #tpu.memory_space<vmem>>, vector<4x8x1xf32>
      %cst_46 = arith.constant dense<0xFF800000> : vector<4x8xf32>
      %60 = vector.multi_reduction <maximumf>, %58, %cst_46 [2] : vector<4x8x8xf32> to vector<4x8xf32>
      %61 = vector.shape_cast %60 : vector<4x8xf32> to vector<4x8x1xf32>
      %62 = arith.maximumf %59, %61 : vector<4x8x1xf32>
      %63 = arith.subf %59, %62 : vector<4x8x1xf32>
      %64 = math.exp %63 : vector<4x8x1xf32>
      %65 = vector.broadcast %62 : vector<4x8x1xf32> to vector<4x8x8xf32>
      %66 = arith.subf %58, %65 : vector<4x8x8xf32>
      %67 = math.exp %66 : vector<4x8x8xf32>
      %c0_47 = arith.constant 0 : index
      %c0_48 = arith.constant 0 : index
      %c0_49 = arith.constant 0 : index
      %68 = vector.load %arg14[%c0_47, %c0_48, %c0_49] : memref<4x8x1xf32, #tpu.memory_space<vmem>>, vector<4x8x1xf32>
      %69 = arith.mulf %64, %68 : vector<4x8x1xf32>
      %cst_50 = arith.constant dense<0.000000e+00> : vector<4x8xf32>
      %70 = vector.multi_reduction <add>, %67, %cst_50 [2] : vector<4x8x8xf32> to vector<4x8xf32>
      %71 = vector.shape_cast %70 : vector<4x8xf32> to vector<4x8x1xf32>
      %72 = arith.addf %69, %71 : vector<4x8x1xf32>
      %c0_51 = arith.constant 0 : index
      %c0_52 = arith.constant 0 : index
      %c0_53 = arith.constant 0 : index
      %73 = vector.load %arg14[%c0_51, %c0_52, %c0_53] : memref<4x8x1xf32, #tpu.memory_space<vmem>>, vector<4x8x1xf32>
      tpu.vector_store %arg14[%c0_51, %c0_52, %c0_53], %72 {strides = array<i32>} : memref<4x8x1xf32, #tpu.memory_space<vmem>>, vector<4x8x1xf32>,
      "tpu.trace_start"() <{level = 10 : i32, message = "hqk,hkd->hqd"}> : () -> ()
      %cst_54 = arith.constant dense<0.000000e+00> : vector<4x8x8xf32>
      %74 = tpu.matmul %67, %46, %cst_54 {dimension_numbers = #tpu.dot_dimension_numbers<[2], [1], [1], [2], [0, 0, 0, 1, 1, 2], [0], [0]>} : vector<4x8x8xf32>, vector<4x8x8xf32>, vector<4x8x8xf32> -> vector<4x8x8xf32>
      "tpu.trace_stop"() : () -> ()
      %c0_55 = arith.constant 0 : index
      %c0_56 = arith.constant 0 : index
      %c0_57 = arith.constant 0 : index
      %75 = vector.load %arg15[%c0_55, %c0_56, %c0_57] : memref<4x8x8xf32, #tpu.memory_space<vmem>>, vector<4x8x8xf32>
      %76 = vector.broadcast %64 : vector<4x8x1xf32> to vector<4x8x8xf32>
      %77 = arith.mulf %76, %75 : vector<4x8x8xf32>
      %78 = arith.addf %77, %74 : vector<4x8x8xf32>
      %c0_58 = arith.constant 0 : index
      %c0_59 = arith.constant 0 : index
      %c0_60 = arith.constant 0 : index
      %79 = vector.load %arg15[%c0_58, %c0_59, %c0_60] : memref<4x8x8xf32, #tpu.memory_space<vmem>>, vector<4x8x8xf32>
      tpu.vector_store %arg15[%c0_58, %c0_59, %c0_60], %78 {strides = array<i32>} : memref<4x8x8xf32, #tpu.memory_space<vmem>>, vector<4x8x8xf32>,
      %c0_61 = arith.constant 0 : index
      %c0_62 = arith.constant 0 : index
      %c0_63 = arith.constant 0 : index
      %80 = vector.load %arg13[%c0_61, %c0_62, %c0_63] : memref<4x8x1xf32, #tpu.memory_space<vmem>>, vector<4x8x1xf32>
      tpu.vector_store %arg13[%c0_61, %c0_62, %c0_63], %62 {strides = array<i32>} : memref<4x8x1xf32, #tpu.memory_space<vmem>>, vector<4x8x1xf32>,
    }
    %c0_22 = arith.constant 0 : index
    %c0_23 = arith.constant 0 : index
    %c0_24 = arith.constant 0 : index
    %26 = vector.load %arg15[%c0_22, %c0_23, %c0_24] : memref<4x8x8xf32, #tpu.memory_space<vmem>>, vector<4x8x8xf32>
    %c0_25 = arith.constant 0 : index
    %c0_26 = arith.constant 0 : index
    %c0_27 = arith.constant 0 : index
    %27 = vector.load %arg14[%c0_25, %c0_26, %c0_27] : memref<4x8x1xf32, #tpu.memory_space<vmem>>, vector<4x8x1xf32>
    %28 = tpu.reciprocal %27 {approx = true} : vector<4x8x1xf32> -> vector<4x8x1xf32>
    %29 = vector.broadcast %28 : vector<4x8x1xf32> to vector<4x8x8xf32>
    %30 = arith.mulf %26, %29 : vector<4x8x8xf32>
    %31 = tpu.transpose %30, [1, 0, 2] : vector<4x8x8xf32> -> vector<8x4x8xf32>
    %32 = vector.shape_cast %31 : vector<8x4x8xf32> to vector<8x32xf32>
    %c0_28 = arith.constant 0 : index
    %c0_29 = arith.constant 0 : index
    %33 = vector.load %arg7[%c0_28, %c0_29] : memref<32x32xf32, #tpu.memory_space<vmem>>, vector<32x32xf32>
    %cst_30 = arith.constant dense<0.000000e+00> : vector<8x32xf32>
    %34 = tpu.matmul %32, %33, %cst_30 {dimension_numbers = #tpu.dot_dimension_numbers<[1], [0], [0], [1], [0, 0, 1, 1], [], []>} : vector<8x32xf32>, vector<32x32xf32>, vector<8x32xf32> -> vector<8x32xf32>
    %c0_31 = arith.constant 0 : index
    %c0_32 = arith.constant 0 : index
    %35 = vector.load %arg8[%c0_31, %c0_32] : memref<1x32xf32, #tpu.memory_space<vmem>>, vector<1x32xf32>
    %36 = vector.broadcast %35 : vector<1x32xf32> to vector<8x32xf32>
    %37 = arith.addf %34, %36 : vector<8x32xf32>
    %c0_33 = arith.constant 0 : index
    %c0_34 = arith.constant 0 : index
    %c0_35 = arith.constant 0 : index
    %38 = vector.load %arg9[%c0_33, %c0_34, %c0_35] : memref<1x8x32xf32, #tpu.memory_space<vmem>>, vector<1x8x32xf32>
    %39 = vector.shape_cast %38 : vector<1x8x32xf32> to vector<8x32xf32>
    %40 = vector.shape_cast %37 : vector<8x32xf32> to vector<1x8x32xf32>
    tpu.vector_store %arg9[%c0_33, %c0_34, %c0_35], %40 {strides = array<i32>} : memref<1x8x32xf32, #tpu.memory_space<vmem>>, vector<1x8x32xf32>,
    return
  }
  func.func @transform_0(%arg0: i32, %arg1: i32) -> (i32, i32, i32) {
    %c0_i32 = arith.constant 0 : i32
    %c0_i32_0 = arith.constant 0 : i32
    %c0_i32_1 = arith.constant 0 : i32
    return %arg0, %c0_i32, %c0_i32_0 : i32, i32, i32
  }
  func.func @transform_1(%arg0: i32, %arg1: i32) -> (i32, i32) {
    %c0_i32 = arith.constant 0 : i32
    %c0_i32_0 = arith.constant 0 : i32
    %c0_i32_1 = arith.constant 0 : i32
    return %c0_i32, %c0_i32_0 : i32, i32
  }
  func.func @transform_2(%arg0: i32, %arg1: i32) -> (i32, i32) {
    %c0_i32 = arith.constant 0 : i32
    %c0_i32_0 = arith.constant 0 : i32
    %c0_i32_1 = arith.constant 0 : i32
    return %c0_i32, %c0_i32_0 : i32, i32
  }
  func.func @transform_3(%arg0: i32, %arg1: i32) -> (i32, i32) {
    %c0_i32 = arith.constant 0 : i32
    %c0_i32_0 = arith.constant 0 : i32
    %c0_i32_1 = arith.constant 0 : i32
    return %c0_i32, %c0_i32_0 : i32, i32
  }
  func.func @transform_4(%arg0: i32, %arg1: i32) -> (i32, i32) {
    %c0_i32 = arith.constant 0 : i32
    %c0_i32_0 = arith.constant 0 : i32
    %c0_i32_1 = arith.constant 0 : i32
    return %c0_i32, %c0_i32_0 : i32, i32
  }
  func.func @transform_5(%arg0: i32, %arg1: i32) -> (i32, i32) {
    %c0_i32 = arith.constant 0 : i32
    %c0_i32_0 = arith.constant 0 : i32
    %c0_i32_1 = arith.constant 0 : i32
    return %c0_i32, %c0_i32_0 : i32, i32
  }
  func.func @transform_6(%arg0: i32, %arg1: i32) -> (i32, i32) {
    %c0_i32 = arith.constant 0 : i32
    %c0_i32_0 = arith.constant 0 : i32
    %c0_i32_1 = arith.constant 0 : i32
    return %c0_i32, %c0_i32_0 : i32, i32
  }
  func.func @transform_7(%arg0: i32, %arg1: i32) -> (i32, i32, i32) {
    %c0_i32 = arith.constant 0 : i32
    %c0_i32_0 = arith.constant 0 : i32
    return %arg0, %arg1, %c0_i32 : i32, i32, i32
  }
  func.func @transform_8(%arg0: i32, %arg1: i32) -> (i32, i32, i32, i32) {
    %c0_i32 = arith.constant 0 : i32
    %c0_i32_0 = arith.constant 0 : i32
    %c0_i32_1 = arith.constant 0 : i32
    %c0_i32_2 = arith.constant 0 : i32
    return %arg0, %c0_i32, %c0_i32_0, %c0_i32_1 : i32, i32, i32, i32
  }
}

</mosaic_0001>

<llo_original>
// kernel: tpu_custom_call.1
$region0: #{tpu_custom_call.1}
  #allocation0 [shape = 'u32[]', space=smem, size = 0x4, offset = 0x4, fixed_abs, tag = 'smem constant byte address 0x4 - core index']
  #allocation1 [shape = 'u32[144,128]{1,0:T(1,128)}', space=vmem, size = 0x12000, scoped, tag = 'internal scratch']
  #allocation2 [shape = 'f32[4,8,8]{2,1,0:T(8,128)}', space=vmem, size = 0x4000, scoped, tag = 'scratch operand']
  #allocation3 [shape = 'f32[4,8,8]{2,1,0:T(8,128)}', space=vmem, size = 0x4000, scoped, tag = 'scratch operand']
  #allocation4 [shape = 'f32[4,8,1]{2,1,0:T(8,128)}', space=vmem, size = 0x4000, scoped, tag = 'scratch operand']
  #allocation5 [shape = 'f32[4,8,1]{2,1,0:T(8,128)}', space=vmem, size = 0x4000, scoped, tag = 'scratch operand']
  #allocation6 [shape = 'f32[4,8,8]{2,1,0:T(8,128)}', space=vmem, size = 0x4000, scoped, tag = 'scratch operand']
  %s0 = inlined_call_operand.hbm [shape: f32[2,8,32], index: 0, kind: input, shape index: {}]
  %s1 = inlined_call_operand.hbm [shape: f32[32,32], index: 1, kind: input, shape index: {}]
  %s2 = inlined_call_operand.hbm [shape: f32[32,64], index: 2, kind: input, shape index: {}]
  %s3 = inlined_call_operand.hbm [shape: f32[1,32], index: 3, kind: input, shape index: {}]
  %s4 = inlined_call_operand.hbm [shape: f32[1,64], index: 4, kind: input, shape index: {}]
  %s5 = inlined_call_operand.hbm [shape: f32[32,32], index: 5, kind: input, shape index: {}]
  %s6 = inlined_call_operand.hbm [shape: f32[1,32], index: 6, kind: input, shape index: {}]
  %s7 = inlined_call_operand.hbm [shape: f32[2,8,32], index: 7, kind: output, shape index: {0}]
  %s8 = inlined_call_operand.hbm [shape: f32[2,2,8,32], index: 8, kind: output, shape index: {1}]
  %9 = xla_tuple %s7, %s8
  %s10 = sld [smem:[#allocation0]]
  $region108: #{tpu_custom_call.1} parent=0
    _
  %s12 = ssub.s32 1, %s10
  %s13 = scalar_select 0, %s12, %s10
  $region1: #{tpu_custom_call.1} parent=0
    #allocation7 [shape = 'u8[8192]{0}', space=vmem, size = 0x2000, scoped, tag = 'input window, operand 0']
    #allocation8 [shape = 's32[2]{0}', space=sflag, size = 0x8, scoped, tag = 'scoped memory for tpu_custom_call.1']
    #allocation9 [shape = 's32[2]{0}', space=sflag, size = 0x8, scoped, tag = 'scoped memory for tpu_custom_call.1']
    #allocation10 [shape = 'u8[16384]{0}', space=vmem, size = 0x4000, scoped, tag = 'input window, operand 1, single buffered']
    #allocation11 [shape = 's32[1]{0}', space=sflag, size = 0x4, scoped, tag = 'scoped memory for tpu_custom_call.1']
    #allocation12 [shape = 'u8[16384]{0}', space=vmem, size = 0x4000, scoped, tag = 'input window, operand 2, single buffered']
    #allocation13 [shape = 'u8[512]{0}', space=vmem, size = 0x400, scoped, tag = 'input window, operand 3, single buffered']
    #allocation14 [shape = 's32[1]{0}', space=sflag, size = 0x4, scoped, tag = 'scoped memory for tpu_custom_call.1']
    #allocation15 [shape = 'u8[512]{0}', space=vmem, size = 0x400, scoped, tag = 'input window, operand 4, single buffered']
    #allocation16 [shape = 'u8[16384]{0}', space=vmem, size = 0x4000, scoped, tag = 'input window, operand 5, single buffered']
    #allocation17 [shape = 's32[1]{0}', space=sflag, size = 0x4, scoped, tag = 'scoped memory for tpu_custom_call.1']
    #allocation18 [shape = 'u8[512]{0}', space=vmem, size = 0x400, scoped, tag = 'input window, operand 6, single buffered']
    #allocation19 [shape = 'u8[8192]{0}', space=vmem, size = 0x2000, scoped, tag = 'output window, operand 0']
    #allocation20 [shape = 'u8[16384]{0}', space=vmem, size = 0x4000, scoped, tag = 'output window, operand 1']
    #allocation21 [shape = 's32[2]{0}', space=sflag, size = 0x8, scoped, tag = 'scoped memory for tpu_custom_call.1']
    %14 = vsyncpa [#allocation8], 0
    %s15 = scalar_lea.sflag [#allocation8], 1
    %16 = vsyncpa %s15, 0
    %17 = vsyncpa [#allocation11], 0
    %18 = vsyncpa [#allocation14], 0
    %19 = vsyncpa [#allocation17], 0
    %20 = vsyncpa [#allocation9], 0
    %s21 = scalar_lea.sflag [#allocation9], 1
    %22 = vsyncpa %s21, 0
    %23 = vsyncpa [#allocation21], 0
    %s24 = scalar_lea.sflag [#allocation21], 1
    %25 = vsyncpa %s24, 0
    loop: start=0, step=1, limit=4
    $region2: #{tpu_custom_call.1} parent=1 // loop_pre_header
      _
    $region3: #{tpu_custom_call.1} parent=1 // loop_header
      %s27 = sphi 0, %s31
      %p28 = scmp.ge.s32.totalorder %s27, 4
      %s34 = sphi 0, %s46
      %s35 = sphi 0, %s42
      %s36 = sphi 0, %s34
      %s37 = sphi 0, %s35
      %s38 = sphi 0, %s36
      %s39 = sphi 0, %s37
      %s49 = sphi 0, %s51
      %s52 = sphi 0, %s49
      %s53 = sphi 0, %s52
      %s69 = sphi 0, %s53
      %s73 = sphi 0, %s73
      %s75 = sphi 0, %s73
      %s76 = sphi 0, %s75
      %s90 = sphi 0, %s76
      %s94 = sphi 0, %s94
      %s96 = sphi 0, %s94
      %s97 = sphi 0, %s96
      %s111 = sphi 0, %s97
      %s115 = sphi 0, %s115
      %s117 = sphi 0, %s115
      %s118 = sphi 0, %s117
      %s132 = sphi 0, %s118
      %s136 = sphi 0, %s136
      %s138 = sphi 0, %s136
      %s139 = sphi 0, %s138
      %s153 = sphi 0, %s139
      %s157 = sphi 0, %s157
      %s159 = sphi 0, %s157
      %s160 = sphi 0, %s159
      %s174 = sphi 0, %s160
      %s178 = sphi 0, %s178
      %s180 = sphi 0, %s178
      %s181 = sphi 0, %s180
      %s195 = sphi 0, %s181
      %s203 = sphi 0, %s205
      %s206 = sphi 0, %s203
      %s207 = sphi 0, %s206
      %s223 = sphi 0, %s207
      %s229 = sphi 0, %s231
      %s232 = sphi 0, %s229
      %s233 = sphi 0, %s232
      %s249 = sphi 0, %s233
    $region4: #{tpu_custom_call.1} parent=1 // loop_header_branch
      %30 = sbr.rel (%p28) target = $region8
    $region5: #{tpu_custom_call.1} parent=1 // loop_body
      %s32 = ssub.s32 %s27, 1
      %s33 = ssub.s32 %s27, 2
      %s40 = sadd.s32 1, %s35
      %p41 = scmp.ge.s32.totalorder %s40, 1
      %s42 = scalar_select %p41, 0, %s40
      %s43 = sadd.s32 1, %s34
      %s44 = scalar_select %p41, %s43, %s34
      %p45 = scmp.ge.s32.totalorder %s44, 2
      %s46 = scalar_select %p45, 0, %s44
      %s47 = ssub.s32 %s34, %s46
      %p48 = scmp.eq.s32.totalorder %s47, 0
      %s50 = sadd.s32 %s49, 1
      %s51 = scalar_select %p48, %s49, %s50
      %p54 = pneg %p48
      %p55 = scmp.eq.s32.totalorder %s27, 1
      %p56 = por %p54, %p55
      %p57 = scmp.ne.s32.totalorder %s49, %s52
      %p58 = scmp.eq.s32.totalorder %s27, 0
      %p59 = por %p57, %p58
      %p60 = scmp.ne.s32.totalorder %s49, %s52
      %p61 = scmp.eq.s32.totalorder %s32, 1
      %p62 = por %p60, %p61
      %p63 = scmp.ne.s32.totalorder %s52, %s53
      %p64 = scmp.eq.s32.totalorder %s32, 0
      %p65 = por %p63, %p64
      %p66 = scmp.ne.s32.totalorder %s52, %s53
      %p67 = scmp.eq.s32.totalorder %s33, 1
      %p68 = por %p66, %p67
      %p70 = scmp.ne.s32.totalorder %s53, %s69
      %p71 = scmp.eq.s32.totalorder %s33, 0
      %p72 = por %p70, %p71
      %s74 = sadd.s32 %s73, 1
      %p77 = scmp.eq.s32.totalorder %s27, 1
      %p78 = scmp.ne.s32.totalorder %s73, %s75
      %p79 = scmp.eq.s32.totalorder %s27, 0
      %p80 = por %p78, %p79
      %p81 = scmp.ne.s32.totalorder %s73, %s75
      %p82 = scmp.eq.s32.totalorder %s32, 1
      %p83 = por %p81, %p82
      %p84 = scmp.ne.s32.totalorder %s75, %s76
      %p85 = scmp.eq.s32.totalorder %s32, 0
      %p86 = por %p84, %p85
      %p87 = scmp.ne.s32.totalorder %s75, %s76
      %p88 = scmp.eq.s32.totalorder %s33, 1
      %p89 = por %p87, %p88
      %p91 = scmp.ne.s32.totalorder %s76, %s90
      %p92 = scmp.eq.s32.totalorder %s33, 0
      %p93 = por %p91, %p92
      %s95 = sadd.s32 %s94, 1
      %p98 = scmp.eq.s32.totalorder %s27, 1
      %p99 = scmp.ne.s32.totalorder %s94, %s96
      %p100 = scmp.eq.s32.totalorder %s27, 0
      %p101 = por %p99, %p100
      %p102 = scmp.ne.s32.totalorder %s94, %s96
      %p103 = scmp.eq.s32.totalorder %s32, 1
      %p104 = por %p102, %p103
      %p105 = scmp.ne.s32.totalorder %s96, %s97
      %p106 = scmp.eq.s32.totalorder %s32, 0
      %p107 = por %p105, %p106
      %p108 = scmp.ne.s32.totalorder %s96, %s97
      %p109 = scmp.eq.s32.totalorder %s33, 1
      %p110 = por %p108, %p109
      %p112 = scmp.ne.s32.totalorder %s97, %s111
      %p113 = scmp.eq.s32.totalorder %s33, 0
      %p114 = por %p112, %p113
      %s116 = sadd.s32 %s115, 1
      %p119 = scmp.eq.s32.totalorder %s27, 1
      %p120 = scmp.ne.s32.totalorder %s115, %s117
      %p121 = scmp.eq.s32.totalorder %s27, 0
      %p122 = por %p120, %p121
      %p123 = scmp.ne.s32.totalorder %s115, %s117
      %p124 = scmp.eq.s32.totalorder %s32, 1
      %p125 = por %p123, %p124
      %p126 = scmp.ne.s32.totalorder %s117, %s118
      %p127 = scmp.eq.s32.totalorder %s32, 0
      %p128 = por %p126, %p127
      %p129 = scmp.ne.s32.totalorder %s117, %s118
      %p130 = scmp.eq.s32.totalorder %s33, 1
      %p131 = por %p129, %p130
      %p133 = scmp.ne.s32.totalorder %s118, %s132
      %p134 = scmp.eq.s32.totalorder %s33, 0
      %p135 = por %p133, %p134
      %s137 = sadd.s32 %s136, 1
      %p140 = scmp.eq.s32.totalorder %s27, 1
      %p141 = scmp.ne.s32.totalorder %s136, %s138
      %p142 = scmp.eq.s32.totalorder %s27, 0
      %p143 = por %p141, %p142
      %p144 = scmp.ne.s32.totalorder %s136, %s138
      %p145 = scmp.eq.s32.totalorder %s32, 1
      %p146 = por %p144, %p145
      %p147 = scmp.ne.s32.totalorder %s138, %s139
      %p148 = scmp.eq.s32.totalorder %s32, 0
      %p149 = por %p147, %p148
      %p150 = scmp.ne.s32.totalorder %s138, %s139
      %p151 = scmp.eq.s32.totalorder %s33, 1
      %p152 = por %p150, %p151
      %p154 = scmp.ne.s32.totalorder %s139, %s153
      %p155 = scmp.eq.s32.totalorder %s33, 0
      %p156 = por %p154, %p155
      %s158 = sadd.s32 %s157, 1
      %p161 = scmp.eq.s32.totalorder %s27, 1
      %p162 = scmp.ne.s32.totalorder %s157, %s159
      %p163 = scmp.eq.s32.totalorder %s27, 0
      %p164 = por %p162, %p163
      %p165 = scmp.ne.s32.totalorder %s157, %s159
      %p166 = scmp.eq.s32.totalorder %s32, 1
      %p167 = por %p165, %p166
      %p168 = scmp.ne.s32.totalorder %s159, %s160
      %p169 = scmp.eq.s32.totalorder %s32, 0
      %p170 = por %p168, %p169
      %p171 = scmp.ne.s32.totalorder %s159, %s160
      %p172 = scmp.eq.s32.totalorder %s33, 1
      %p173 = por %p171, %p172
      %p175 = scmp.ne.s32.totalorder %s160, %s174
      %p176 = scmp.eq.s32.totalorder %s33, 0
      %p177 = por %p175, %p176
      %s179 = sadd.s32 %s178, 1
      %p182 = scmp.eq.s32.totalorder %s27, 1
      %p183 = scmp.ne.s32.totalorder %s178, %s180
      %p184 = scmp.eq.s32.totalorder %s27, 0
      %p185 = por %p183, %p184
      %p186 = scmp.ne.s32.totalorder %s178, %s180
      %p187 = scmp.eq.s32.totalorder %s32, 1
      %p188 = por %p186, %p187
      %p189 = scmp.ne.s32.totalorder %s180, %s181
      %p190 = scmp.eq.s32.totalorder %s32, 0
      %p191 = por %p189, %p190
      %p192 = scmp.ne.s32.totalorder %s180, %s181
      %p193 = scmp.eq.s32.totalorder %s33, 1
      %p194 = por %p192, %p193
      %p196 = scmp.ne.s32.totalorder %s181, %s195
      %p197 = scmp.eq.s32.totalorder %s33, 0
      %p198 = por %p196, %p197
      %s199 = ssub.s32 %s34, %s46
      %s200 = ssub.s32 %s35, %s42
      %s201 = sor.u32 %s199, %s200
      %p202 = scmp.eq.s32.totalorder %s201, 0
      %s204 = sadd.s32 %s203, 1
      %s205 = scalar_select %p202, %s203, %s204
      %p208 = pneg %p202
      %p209 = scmp.eq.s32.totalorder %s27, 1
      %p210 = por %p208, %p209
      %p211 = scmp.ne.s32.totalorder %s203, %s206
      %p212 = scmp.eq.s32.totalorder %s27, 0
      %p213 = por %p211, %p212
      %p214 = scmp.ne.s32.totalorder %s203, %s206
      %p215 = scmp.eq.s32.totalorder %s32, 1
      %p216 = por %p214, %p215
      %p217 = scmp.ne.s32.totalorder %s206, %s207
      %p218 = scmp.eq.s32.totalorder %s32, 0
      %p219 = por %p217, %p218
      %p220 = scmp.ne.s32.totalorder %s206, %s207
      %p221 = scmp.eq.s32.totalorder %s33, 1
      %p222 = por %p220, %p221
      %p224 = scmp.ne.s32.totalorder %s207, %s223
      %p225 = scmp.eq.s32.totalorder %s33, 0
      %p226 = por %p224, %p225
      %s227 = ssub.s32 %s34, %s46
      %p228 = scmp.eq.s32.totalorder %s227, 0
      %s230 = sadd.s32 %s229, 1
      %s231 = scalar_select %p228, %s229, %s230
      %p234 = pneg %p228
      %p235 = scmp.eq.s32.totalorder %s27, 1
      %p236 = por %p234, %p235
      %p237 = scmp.ne.s32.totalorder %s229, %s232
      %p238 = scmp.eq.s32.totalorder %s27, 0
      %p239 = por %p237, %p238
      %p240 = scmp.ne.s32.totalorder %s229, %s232
      %p241 = scmp.eq.s32.totalorder %s32, 1
      %p242 = por %p240, %p241
      %p243 = scmp.ne.s32.totalorder %s232, %s233
      %p244 = scmp.eq.s32.totalorder %s32, 0
      %p245 = por %p243, %p244
      %p246 = scmp.ne.s32.totalorder %s232, %s233
      %p247 = scmp.eq.s32.totalorder %s33, 1
      %p248 = por %p246, %p247
      %p250 = scmp.ne.s32.totalorder %s233, %s249
      %p251 = scmp.eq.s32.totalorder %s33, 0
      %p252 = por %p250, %p251
      %p253 = scmp.le.s32.totalorder 1, %s27
      %p254 = scmp.lt.s32.totalorder %s27, 3
      %p255 = pnand %p253, %p254
      %p256 = pneg %p255
      // Predicated region
      $region9: #{tpu_custom_call.1} parent=5 // pred_check
        _
      $region10: #{tpu_custom_call.1} parent=5 // pred_check_branch
        %258 = sbr.rel (%p255) target = $region12
      $region11: #{tpu_custom_call.1} parent=5 // pred_region
        %s259 = ssub.s32 %s27, 1
        // Predicated region
        $region13: #{tpu_custom_call.1} parent=11 // pred_check
          %p260 = pneg %p86
        $region14: #{tpu_custom_call.1} parent=11 // pred_check_branch
          %262 = sbr.rel (%p260) target = $region16
        $region15: #{tpu_custom_call.1} parent=11 // pred_region
          %s264 = ssub.s32 512, 512
          %265 = vsyncadd [#allocation11], %s264
          %s266 = sshll.u32 [#allocation10], 4
          %s267 = int_to_ptr.vmem [resolvable:$true] %s266
          %272 = dma.hbm_to_vmem [thread:$0]  %s1, 512, %s267, [#allocation11], 128, 128, 8
        $region16: #{tpu_custom_call.1} parent=11 // pred_fallthru
          _
        // Predicated region
        $region17: #{tpu_custom_call.1} parent=11 // pred_check
          %p273 = pneg %p107
        $region18: #{tpu_custom_call.1} parent=11 // pred_check_branch
          %275 = sbr.rel (%p273) target = $region20
        $region19: #{tpu_custom_call.1} parent=11 // pred_region
          %s277 = ssub.s32 512, 512
          %278 = vsyncadd [#allocation11], %s277
          %s279 = sshll.u32 [#allocation12], 4
          %s280 = int_to_ptr.vmem [resolvable:$true] %s279
          %285 = dma.hbm_to_vmem [thread:$0]  %s2, 512, %s280, [#allocation11], 128, 128, 8
        $region20: #{tpu_custom_call.1} parent=11 // pred_fallthru
          _
        // Predicated region
        $region21: #{tpu_custom_call.1} parent=11 // pred_check
          %p286 = pneg %p128
        $region22: #{tpu_custom_call.1} parent=11 // pred_check_branch
          %288 = sbr.rel (%p286) target = $region24
        $region23: #{tpu_custom_call.1} parent=11 // pred_region
          %s290 = ssub.s32 16, 16
          %291 = vsyncadd [#allocation14], %s290
          %s293 = sshll.u32 [#allocation13], 4
          %s294 = int_to_ptr.vmem [resolvable:$true] %s293
          %296 = dma.hbm_to_vmem [thread:$0]  %s3, 16, %s294, [#allocation14]
        $region24: #{tpu_custom_call.1} parent=11 // pred_fallthru
          _
        // Predicated region
        $region25: #{tpu_custom_call.1} parent=11 // pred_check
          %p297 = pneg %p149
        $region26: #{tpu_custom_call.1} parent=11 // pred_check_branch
          %299 = sbr.rel (%p297) target = $region28
        $region27: #{tpu_custom_call.1} parent=11 // pred_region
          %s301 = ssub.s32 16, 16
          %302 = vsyncadd [#allocation14], %s301
          %s304 = sshll.u32 [#allocation15], 4
          %s305 = int_to_ptr.vmem [resolvable:$true] %s304
          %307 = dma.hbm_to_vmem [thread:$0]  %s4, 16, %s305, [#allocation14]
        $region28: #{tpu_custom_call.1} parent=11 // pred_fallthru
          _
        // Predicated region
        $region29: #{tpu_custom_call.1} parent=11 // pred_check
          %p308 = pneg %p170
        $region30: #{tpu_custom_call.1} parent=11 // pred_check_branch
          %310 = sbr.rel (%p308) target = $region32
        $region31: #{tpu_custom_call.1} parent=11 // pred_region
          %s312 = ssub.s32 512, 512
          %313 = vsyncadd [#allocation17], %s312
          %s314 = sshll.u32 [#allocation16], 4
          %s315 = int_to_ptr.vmem [resolvable:$true] %s314
          %320 = dma.hbm_to_vmem [thread:$0]  %s5, 512, %s315, [#allocation17], 128, 128, 8
        $region32: #{tpu_custom_call.1} parent=11 // pred_fallthru
          _
        // Predicated region
        $region33: #{tpu_custom_call.1} parent=11 // pred_check
          %p321 = pneg %p191
        $region34: #{tpu_custom_call.1} parent=11 // pred_check_branch
          %323 = sbr.rel (%p321) target = $region36
        $region35: #{tpu_custom_call.1} parent=11 // pred_region
          %s325 = ssub.s32 16, 16
          %326 = vsyncadd [#allocation17], %s325
          %s328 = sshll.u32 [#allocation18], 4
          %s329 = int_to_ptr.vmem [resolvable:$true] %s328
          %331 = dma.hbm_to_vmem [thread:$0]  %s6, 16, %s329, [#allocation17]
        $region36: #{tpu_custom_call.1} parent=11 // pred_fallthru
          _
      $region12: #{tpu_custom_call.1} parent=5 // pred_fallthru
        _
      %p332 = scmp.lt.s32.totalorder %s27, 2
      // Predicated region
      $region37: #{tpu_custom_call.1} parent=5 // pred_check
        %p333 = pneg %p332
      $region38: #{tpu_custom_call.1} parent=5 // pred_check_branch
        %335 = sbr.rel (%p333) target = $region40
      $region39: #{tpu_custom_call.1} parent=5 // pred_region
        // Predicated region
        $region41: #{tpu_custom_call.1} parent=39 // pred_check
          %p336 = pneg %p59
        $region42: #{tpu_custom_call.1} parent=39 // pred_check_branch
          %338 = sbr.rel (%p336) target = $region44
        $region43: #{tpu_custom_call.1} parent=39 // pred_region
          %s339 = sand.u32 %s49, 1
          %s340 = scalar_lea.sflag [#allocation8], %s339
          %s341 = sand.u32 %s49, 1
          %s342 = smul.addr %s341, 8
          %s343 = scalar_lea.vmem [#allocation7], %s342
          %s345 = ssub.s32 128, 128
          %346 = vsyncadd %s340, %s345
          %s347 = smul.addr %s34, 128
          %s348 = scalar_lea.hbm %s0, %s347
          %s350 = sshll.u32 %s343, 4
          %s351 = int_to_ptr.vmem [resolvable:$true] %s350
          %353 = dma.hbm_to_vmem [thread:$0]  %s348, 128, %s351, %s340
        $region44: #{tpu_custom_call.1} parent=39 // pred_fallthru
          _
      $region40: #{tpu_custom_call.1} parent=5 // pred_fallthru
        _
      %p354 = scmp.le.s32.totalorder 1, %s27
      %p355 = scmp.lt.s32.totalorder %s27, 3
      %p356 = pnand %p354, %p355
      %p357 = pneg %p356
      // Predicated region
      $region45: #{tpu_custom_call.1} parent=5 // pred_check
        _
      $region46: #{tpu_custom_call.1} parent=5 // pred_check_branch
        %359 = sbr.rel (%p356) target = $region48
      $region47: #{tpu_custom_call.1} parent=5 // pred_region
        %s360 = ssub.s32 %s27, 1
        %s361 = sand.u32 %s52, 1
        %s362 = scalar_lea.sflag [#allocation8], %s361
        %s363 = sand.u32 %s52, 1
        %s364 = smul.addr %s363, 8
        %s365 = scalar_lea.vmem [#allocation7], %s364
        // Predicated region
        $region49: #{tpu_custom_call.1} parent=47 // pred_check
          %p366 = pneg %p65
        $region50: #{tpu_custom_call.1} parent=47 // pred_check_branch
          %368 = sbr.rel (%p366) target = $region52
        $region51: #{tpu_custom_call.1} parent=47 // pred_region
          %369 = dma.done %s362, 128
        $region52: #{tpu_custom_call.1} parent=47 // pred_fallthru
          _
        // Predicated region
        $region53: #{tpu_custom_call.1} parent=47 // pred_check
          %p370 = pneg %p86
        $region54: #{tpu_custom_call.1} parent=47 // pred_check_branch
          %372 = sbr.rel (%p370) target = $region56
        $region55: #{tpu_custom_call.1} parent=47 // pred_region
          %373 = dma.done [#allocation11], 512
        $region56: #{tpu_custom_call.1} parent=47 // pred_fallthru
          _
        // Predicated region
        $region57: #{tpu_custom_call.1} parent=47 // pred_check
          %p374 = pneg %p107
        $region58: #{tpu_custom_call.1} parent=47 // pred_check_branch
          %376 = sbr.rel (%p374) target = $region60
        $region59: #{tpu_custom_call.1} parent=47 // pred_region
          %377 = dma.done [#allocation11], 512
        $region60: #{tpu_custom_call.1} parent=47 // pred_fallthru
          _
        // Predicated region
        $region61: #{tpu_custom_call.1} parent=47 // pred_check
          %p378 = pneg %p128
        $region62: #{tpu_custom_call.1} parent=47 // pred_check_branch
          %380 = sbr.rel (%p378) target = $region64
        $region63: #{tpu_custom_call.1} parent=47 // pred_region
          %381 = dma.done [#allocation14], 16
        $region64: #{tpu_custom_call.1} parent=47 // pred_fallthru
          _
        // Predicated region
        $region65: #{tpu_custom_call.1} parent=47 // pred_check
          %p382 = pneg %p149
        $region66: #{tpu_custom_call.1} parent=47 // pred_check_branch
          %384 = sbr.rel (%p382) target = $region68
        $region67: #{tpu_custom_call.1} parent=47 // pred_region
          %385 = dma.done [#allocation14], 16
        $region68: #{tpu_custom_call.1} parent=47 // pred_fallthru
          _
        // Predicated region
        $region69: #{tpu_custom_call.1} parent=47 // pred_check
          %p386 = pneg %p170
        $region70: #{tpu_custom_call.1} parent=47 // pred_check_branch
          %388 = sbr.rel (%p386) target = $region72
        $region71: #{tpu_custom_call.1} parent=47 // pred_region
          %389 = dma.done [#allocation17], 512
        $region72: #{tpu_custom_call.1} parent=47 // pred_fallthru
          _
        // Predicated region
        $region73: #{tpu_custom_call.1} parent=47 // pred_check
          %p390 = pneg %p191
        $region74: #{tpu_custom_call.1} parent=47 // pred_check_branch
          %392 = sbr.rel (%p390) target = $region76
        $region75: #{tpu_custom_call.1} parent=47 // pred_region
          %393 = dma.done [#allocation17], 16
        $region76: #{tpu_custom_call.1} parent=47 // pred_fallthru
          _
        %s394 = sand.u32 %s52, 1
        %s395 = scalar_lea.sflag [#allocation8], %s394
        %s396 = sand.u32 %s52, 1
        %s397 = smul.addr %s396, 8
        %s398 = scalar_lea.vmem [#allocation7], %s397
        %p399 = pneg %p65
        %p400 = pneg %p62
        %p401 = pneg %p86
        %p402 = pneg %p83
        %p403 = pneg %p107
        %p404 = pneg %p104
        %p405 = pneg %p128
        %p406 = pneg %p125
        %p407 = pneg %p149
        %p408 = pneg %p146
        %p409 = pneg %p170
        %p410 = pneg %p167
        %p411 = pneg %p191
        %p412 = pneg %p188
        %p413 = pneg %p219
        %p414 = pneg %p216
        %s415 = sand.u32 %s206, 1
        %s416 = scalar_lea.sflag [#allocation9], %s415
        %s417 = sand.u32 %s206, 1
        %s418 = smul.addr %s417, 8
        %s419 = scalar_lea.vmem [#allocation19], %s418
        %p420 = pneg %p245
        %p421 = pneg %p242
        %s422 = sand.u32 %s232, 1
        %s423 = scalar_lea.sflag [#allocation21], %s422
        %s424 = sand.u32 %s232, 1
        %s425 = smul.addr %s424, 16
        %s426 = scalar_lea.vmem [#allocation20], %s425
        %p427 = scmp.eq.s32.totalorder %s37, 0
        // Predicated region
        $region77: #{tpu_custom_call.1} parent=47 // pred_check
          %p428 = pneg %p427
        $region78: #{tpu_custom_call.1} parent=47 // pred_check_branch
          %430 = sbr.rel (%p428) target = $region80
        $region79: #{tpu_custom_call.1} parent=47 // pred_region
          %v431 = vld [vmem:[%s365] sm:$0xff]
          %v432 = vld [vmem:[#allocation12] sm:$0xff]
          %v433 = vld [vmem:[#allocation12 + $0x8] sm:$0xff]
          %v434 = vld [vmem:[#allocation12 + $0x10] sm:$0xff]
          %v435 = vld [vmem:[#allocation12 + $0x18] sm:$0xff]
          %v436 = vld [vmem:[#allocation15] sm:$0x1]
          %v438 = vlaneseq
          %v439 = vshrl.u32 %v438, 7
          %v440 = vsub.s32 0, %v439
          %v441 = vrot.slane %v436, %v440
          %vm443 = vcmask 261120
          %v445 = vsel %vm443, %v431, 0
          %447 = vmatprep.subr.mxu0 0.0
          %448 = vmatpush1.msra.mxu0 %v432
          %449 = vmatprep.subr.mxu0 0.0
          %450 = vmatpush1.msra.mxu0 %v433
          %451 = vmatprep.subr.mxu0 0.0
          %452 = vmatpush1.msra.mxu0 %v434
          %453 = vmatprep.subr.mxu0 0.0
          %454 = vmatpush1.msra.mxu0 %v435
          %455 = vmatprep.subr.mxu0 0.0
          %456 = vmatpush1.msra.mxu0 0.0
          %457 = vmatprep.subr.mxu0 0.0
          %458 = vmatpush1.msra.mxu0 0.0
          %459 = vmatprep.subr.mxu0 0.0
          %460 = vmatpush1.msra.mxu0 0.0
          %461 = vmatprep.subr.mxu0 0.0
          %462 = vmatpush1.msra.mxu0 0.0
          %463 = vmatprep.subr.mxu0 0.0
          %464 = vmatpush1.msra.mxu0 0.0
          %465 = vmatprep.subr.mxu0 0.0
          %466 = vmatpush1.msra.mxu0 0.0
          %467 = vmatprep.subr.mxu0 0.0
          %468 = vmatpush1.msra.mxu0 0.0
          %469 = vmatprep.subr.mxu0 0.0
          %470 = vmatpush1.msra.mxu0 0.0
          %471 = vmatprep.subr.mxu0 0.0
          %472 = vmatpush1.msra.mxu0 0.0
          %473 = vmatprep.subr.mxu0 0.0
          %474 = vmatpush1.msra.mxu0 0.0
          %475 = vmatprep.subr.mxu0 0.0
          %476 = vmatpush1.msra.mxu0 0.0
          %477 = vmatprep.subr.mxu0 0.0
          %478 = vmatpush1.msra.mxu0 0.0
          %479 = vmatprep.subr.mxu0 0.0
          %480 = vmatpush1.msra.mxu0 0.0
          %481 = vmatprep.subr.mxu0 0.0
          %482 = vmatpush1.msra.mxu0 0.0
          %483 = vmatprep.subr.mxu0 0.0
          %484 = vmatpush1.msra.mxu0 0.0
          %485 = vmatprep.subr.mxu0 0.0
          %486 = vmatpush1.msra.mxu0 0.0
          %487 = vmatprep.subr.mxu0 0.0
          %488 = vmatpush1.msra.mxu0 0.0
          %489 = vmatprep.subr.mxu0 0.0
          %490 = vmatpush1.msra.mxu0 0.0
          %491 = vmatprep.subr.mxu0 0.0
          %492 = vmatpush1.msra.mxu0 0.0
          %493 = vmatprep.subr.mxu0 0.0
          %494 = vmatpush1.msra.mxu0 0.0
          %495 = vmatprep.subr.mxu0 0.0
          %496 = vmatpush1.msra.mxu0 0.0
          %497 = vmatprep.subr.mxu0 0.0
          %498 = vmatpush1.msra.mxu0 0.0
          %499 = vmatprep.subr.mxu0 0.0
          %500 = vmatpush1.msra.mxu0 0.0
          %501 = vmatprep.subr.mxu0 0.0
          %502 = vmatpush1.msra.mxu0 0.0
          %503 = vmatprep.subr.mxu0 0.0
          %504 = vmatpush1.msra.mxu0 0.0
          %505 = vmatprep.subr.mxu0 0.0
          %506 = vmatpush1.msra.mxu0 0.0
          %507 = vmatprep.subr.mxu0 0.0
          %508 = vmatpush1.msra.mxu0 0.0
          %509 = vmatprep.subr.mxu0 0.0
          %510 = vmatpush1.msra.mxu0 0.0
          %511 = vmatprep.mubr.f32.mxu0 0.0
          %512 = vmatmul.mubr.f32.gmra.mrb[0].mxu0 %v445
          %v513 = vpop.f32.mrb[0].mxu0
          %v514 = vadd.f32 %v441, %v513
          %v515 = vpop.f32.mrb[0].mxu0
          %516 = vdwg.mxu0
          %517 = vst.msk [vmem:[%s426] sm:$0xff] %vm443, %v514
          %519 = vrot.lane.b32.xlu0 %v514, 96
          %v520 = vpop.permute.xlu0 %519
          %s522 = scalar_lea.vmem %s426, 8 [#allocation20]
          %523 = vst.msk [vmem:[%s522] sm:$0xff] %vm443, %v520
          %524 = vrot.lane.b32.xlu0 %v514, 120
          %v525 = vpop.permute.xlu0 %524
          %527 = vrot.lane.b32.xlu0 %v514, 112
          %v528 = vpop.permute.xlu0 %527
          %530 = vrot.lane.b32.xlu0 %v514, 104
          %v531 = vpop.permute.xlu0 %530
          %v533 = vcombine.low %v514, %v528
          %v534 = vcombine.high %v514, %v528
          %v536 = vunpack.c.l.s4 1983009808
          %v537 = vunpack.c.0.s8 %v536
          %v538 = vlaneseq
          %v539 = vshrl.u32 %v538, 7
          %v540 = vsub.s32 %v537, %v539
          %v541 = vrot.slane %v533, %v540
          %v543 = vunpack.c.l.s4 1983009808
          %v544 = vunpack.c.0.s8 %v543
          %v545 = vlaneseq
          %v546 = vshrl.u32 %v545, 7
          %v547 = vsub.s32 %v544, %v546
          %v548 = vrot.slane %v534, %v547
          %v549 = vcombine.low %v525, %v531
          %v550 = vcombine.high %v525, %v531
          %v552 = vunpack.c.l.s4 1983009808
          %v553 = vunpack.c.0.s8 %v552
          %v554 = vlaneseq
          %v555 = vshrl.u32 %v554, 7
          %v556 = vsub.s32 %v553, %v555
          %v557 = vrot.slane %v549, %v556
          %v559 = vunpack.c.l.s4 1983009808
          %v560 = vunpack.c.0.s8 %v559
          %v561 = vlaneseq
          %v562 = vshrl.u32 %v561, 7
          %v563 = vsub.s32 %v560, %v562
          %v564 = vrot.slane %v550, %v563
          %v565 = vcombine.low %v541, %v557
          %v566 = vcombine.high %v541, %v557
          %v568 = vunpack.c.l.s4 1934713408
          %v569 = vunpack.c.0.s8 %v568
          %v570 = vlaneseq
          %v571 = vshrl.u32 %v570, 7
          %v572 = vsub.s32 %v569, %v571
          %v573 = vrot.slane %v565, %v572
          %v575 = vunpack.c.l.s4 1934713408
          %v576 = vunpack.c.0.s8 %v575
          %v577 = vlaneseq
          %v578 = vshrl.u32 %v577, 7
          %v579 = vsub.s32 %v576, %v578
          %v580 = vrot.slane %v566, %v579
          %v581 = vcombine.low %v548, %v564
          %v582 = vcombine.high %v548, %v564
          %v584 = vunpack.c.l.s4 1934713408
          %v585 = vunpack.c.0.s8 %v584
          %v586 = vlaneseq
          %v587 = vshrl.u32 %v586, 7
          %v588 = vsub.s32 %v585, %v587
          %v589 = vrot.slane %v581, %v588
          %v591 = vunpack.c.l.s4 1934713408
          %v592 = vunpack.c.0.s8 %v591
          %v593 = vlaneseq
          %v594 = vshrl.u32 %v593, 7
          %v595 = vsub.s32 %v592, %v594
          %v596 = vrot.slane %v582, %v595
          %v597 = vcombine.high %v573, 0.0
          %v598 = vcombine.high %v580, 0.0
          %v599 = vcombine.high %v589, 0.0
          %v600 = vcombine.high %v596, 0.0
          %v601 = vcombine.low %v573, %v580
          %v603 = vunpack.c.l.s4 1983009808
          %v604 = vunpack.c.0.s8 %v603
          %v605 = vlaneseq
          %v606 = vshrl.u32 %v605, 7
          %v607 = vsub.s32 %v604, %v606
          %v608 = vrot.slane %v601, %v607
          %v609 = vcombine.low %v597, %v598
          %v611 = vunpack.c.l.s4 1983009808
          %v612 = vunpack.c.0.s8 %v611
          %v613 = vlaneseq
          %v614 = vshrl.u32 %v613, 7
          %v615 = vsub.s32 %v612, %v614
          %v616 = vrot.slane %v609, %v615
          %v617 = vcombine.low %v589, %v596
          %v619 = vunpack.c.l.s4 1983009808
          %v620 = vunpack.c.0.s8 %v619
          %v621 = vlaneseq
          %v622 = vshrl.u32 %v621, 7
          %v623 = vsub.s32 %v620, %v622
          %v624 = vrot.slane %v617, %v623
          %v625 = vcombine.low %v599, %v600
          %v627 = vunpack.c.l.s4 1983009808
          %v628 = vunpack.c.0.s8 %v627
          %v629 = vlaneseq
          %v630 = vshrl.u32 %v629, 7
          %v631 = vsub.s32 %v628, %v630
          %v632 = vrot.slane %v625, %v631
          %v633 = vcombine.low %v608, %v616
          %v634 = vcombine.high %v608, %v616
          %v636 = vunpack.c.l.s4 1934713408
          %v637 = vunpack.c.0.s8 %v636
          %v638 = vlaneseq
          %v639 = vshrl.u32 %v638, 7
          %v640 = vsub.s32 %v637, %v639
          %v641 = vrot.slane %v633, %v640
          %v643 = vunpack.c.l.s4 1934713408
          %v644 = vunpack.c.0.s8 %v643
          %v645 = vlaneseq
          %v646 = vshrl.u32 %v645, 7
          %v647 = vsub.s32 %v644, %v646
          %v648 = vrot.slane %v634, %v647
          %v649 = vcombine.low %v624, %v632
          %v650 = vcombine.high %v624, %v632
          %v652 = vunpack.c.l.s4 1934713408
          %v653 = vunpack.c.0.s8 %v652
          %v654 = vlaneseq
          %v655 = vshrl.u32 %v654, 7
          %v656 = vsub.s32 %v653, %v655
          %v657 = vrot.slane %v649, %v656
          %v659 = vunpack.c.l.s4 1934713408
          %v660 = vunpack.c.0.s8 %v659
          %v661 = vlaneseq
          %v662 = vshrl.u32 %v661, 7
          %v663 = vsub.s32 %v660, %v662
          %v664 = vrot.slane %v650, %v663
          %v665 = vcombine.low %v641, %v657
          %v666 = vcombine.high %v641, %v657
          %v667 = vcombine.low %v648, %v664
          %v668 = vcombine.high %v648, %v664
          %vm669 = vcmask 64512
          %670 = vst.msk [vmem:[#allocation2] sm:$0xff] %vm669, %v665
          %671 = vst.msk [vmem:[#allocation2 + $0x8] sm:$0xff] %vm669, %v666
          %672 = vst.msk [vmem:[#allocation2 + $0x10] sm:$0xff] %vm669, %v667
          %673 = vst.msk [vmem:[#allocation2 + $0x18] sm:$0xff] %vm669, %v668
          %674 = vrot.lane.b32.xlu0 %v525, 96
          %v675 = vpop.permute.xlu0 %674
          %676 = vrot.lane.b32.xlu0 %v528, 96
          %v677 = vpop.permute.xlu0 %676
          %678 = vrot.lane.b32.xlu0 %v531, 96
          %v679 = vpop.permute.xlu0 %678
          %v683 = vcombine.low %v520, %v677
          %v684 = vcombine.high %v520, %v677
          %v686 = vunpack.c.l.s4 1983009808
          %v687 = vunpack.c.0.s8 %v686
          %v688 = vlaneseq
          %v689 = vshrl.u32 %v688, 7
          %v690 = vsub.s32 %v687, %v689
          %v691 = vrot.slane %v683, %v690
          %v693 = vunpack.c.l.s4 1983009808
          %v694 = vunpack.c.0.s8 %v693
          %v695 = vlaneseq
          %v696 = vshrl.u32 %v695, 7
          %v697 = vsub.s32 %v694, %v696
          %v698 = vrot.slane %v684, %v697
          %v699 = vcombine.low %v675, %v679
          %v700 = vcombine.high %v675, %v679
          %v702 = vunpack.c.l.s4 1983009808
          %v703 = vunpack.c.0.s8 %v702
          %v704 = vlaneseq
          %v705 = vshrl.u32 %v704, 7
          %v706 = vsub.s32 %v703, %v705
          %v707 = vrot.slane %v699, %v706
          %v709 = vunpack.c.l.s4 1983009808
          %v710 = vunpack.c.0.s8 %v709
          %v711 = vlaneseq
          %v712 = vshrl.u32 %v711, 7
          %v713 = vsub.s32 %v710, %v712
          %v714 = vrot.slane %v700, %v713
          %v715 = vcombine.low %v691, %v707
          %v716 = vcombine.high %v691, %v707
          %v718 = vunpack.c.l.s4 1934713408
          %v719 = vunpack.c.0.s8 %v718
          %v720 = vlaneseq
          %v721 = vshrl.u32 %v720, 7
          %v722 = vsub.s32 %v719, %v721
          %v723 = vrot.slane %v715, %v722
          %v725 = vunpack.c.l.s4 1934713408
          %v726 = vunpack.c.0.s8 %v725
          %v727 = vlaneseq
          %v728 = vshrl.u32 %v727, 7
          %v729 = vsub.s32 %v726, %v728
          %v730 = vrot.slane %v716, %v729
          %v731 = vcombine.low %v698, %v714
          %v732 = vcombine.high %v698, %v714
          %v734 = vunpack.c.l.s4 1934713408
          %v735 = vunpack.c.0.s8 %v734
          %v736 = vlaneseq
          %v737 = vshrl.u32 %v736, 7
          %v738 = vsub.s32 %v735, %v737
          %v739 = vrot.slane %v731, %v738
          %v741 = vunpack.c.l.s4 1934713408
          %v742 = vunpack.c.0.s8 %v741
          %v743 = vlaneseq
          %v744 = vshrl.u32 %v743, 7
          %v745 = vsub.s32 %v742, %v744
          %v746 = vrot.slane %v732, %v745
          %v747 = vcombine.high %v723, 0.0
          %v748 = vcombine.high %v730, 0.0
          %v749 = vcombine.high %v739, 0.0
          %v750 = vcombine.high %v746, 0.0
          %v751 = vcombine.low %v723, %v730
          %v753 = vunpack.c.l.s4 1983009808
          %v754 = vunpack.c.0.s8 %v753
          %v755 = vlaneseq
          %v756 = vshrl.u32 %v755, 7
          %v757 = vsub.s32 %v754, %v756
          %v758 = vrot.slane %v751, %v757
          %v759 = vcombine.low %v747, %v748
          %v761 = vunpack.c.l.s4 1983009808
          %v762 = vunpack.c.0.s8 %v761
          %v763 = vlaneseq
          %v764 = vshrl.u32 %v763, 7
          %v765 = vsub.s32 %v762, %v764
          %v766 = vrot.slane %v759, %v765
          %v767 = vcombine.low %v739, %v746
          %v769 = vunpack.c.l.s4 1983009808
          %v770 = vunpack.c.0.s8 %v769
          %v771 = vlaneseq
          %v772 = vshrl.u32 %v771, 7
          %v773 = vsub.s32 %v770, %v772
          %v774 = vrot.slane %v767, %v773
          %v775 = vcombine.low %v749, %v750
          %v777 = vunpack.c.l.s4 1983009808
          %v778 = vunpack.c.0.s8 %v777
          %v779 = vlaneseq
          %v780 = vshrl.u32 %v779, 7
          %v781 = vsub.s32 %v778, %v780
          %v782 = vrot.slane %v775, %v781
          %v783 = vcombine.low %v758, %v766
          %v784 = vcombine.high %v758, %v766
          %v786 = vunpack.c.l.s4 1934713408
          %v787 = vunpack.c.0.s8 %v786
          %v788 = vlaneseq
          %v789 = vshrl.u32 %v788, 7
          %v790 = vsub.s32 %v787, %v789
          %v791 = vrot.slane %v783, %v790
          %v793 = vunpack.c.l.s4 1934713408
          %v794 = vunpack.c.0.s8 %v793
          %v795 = vlaneseq
          %v796 = vshrl.u32 %v795, 7
          %v797 = vsub.s32 %v794, %v796
          %v798 = vrot.slane %v784, %v797
          %v799 = vcombine.low %v774, %v782
          %v800 = vcombine.high %v774, %v782
          %v802 = vunpack.c.l.s4 1934713408
          %v803 = vunpack.c.0.s8 %v802
          %v804 = vlaneseq
          %v805 = vshrl.u32 %v804, 7
          %v806 = vsub.s32 %v803, %v805
          %v807 = vrot.slane %v799, %v806
          %v809 = vunpack.c.l.s4 1934713408
          %v810 = vunpack.c.0.s8 %v809
          %v811 = vlaneseq
          %v812 = vshrl.u32 %v811, 7
          %v813 = vsub.s32 %v810, %v812
          %v814 = vrot.slane %v800, %v813
          %v815 = vcombine.low %v791, %v807
          %v816 = vcombine.high %v791, %v807
          %v817 = vcombine.low %v798, %v814
          %v818 = vcombine.high %v798, %v814
          %819 = vst.msk [vmem:[#allocation3] sm:$0xff] %vm669, %v815
          %820 = vst.msk [vmem:[#allocation3 + $0x8] sm:$0xff] %vm669, %v816
          %821 = vst.msk [vmem:[#allocation3 + $0x10] sm:$0xff] %vm669, %v817
          %822 = vst.msk [vmem:[#allocation3 + $0x18] sm:$0xff] %vm669, %v818
        $region80: #{tpu_custom_call.1} parent=47 // pred_fallthru
          _
        %s823 = smul.u32 %s37, 8
        %s824 = scalar_lea.vmem %s365, %s823 [#allocation7]
        %v825 = vld [vmem:[%s824] sm:$0xff]
        %v826 = vld [vmem:[#allocation10] sm:$0xff]
        %v827 = vld [vmem:[#allocation10 + $0x8] sm:$0xff]
        %v828 = vld [vmem:[#allocation10 + $0x10] sm:$0xff]
        %v829 = vld [vmem:[#allocation10 + $0x18] sm:$0xff]
        %v830 = vld [vmem:[#allocation13] sm:$0x1]
        %v832 = vlaneseq
        %v833 = vshrl.u32 %v832, 7
        %v834 = vsub.s32 0, %v833
        %v835 = vrot.slane %v830, %v834
        %vm837 = vcmask 261120
        %v839 = vsel %vm837, %v825, 0
        %841 = vmatprep.subr.mxu0 0.0
        %842 = vmatpush1.msra.mxu0 %v826
        %843 = vmatprep.subr.mxu0 0.0
        %844 = vmatpush1.msra.mxu0 %v827
        %845 = vmatprep.subr.mxu0 0.0
        %846 = vmatpush1.msra.mxu0 %v828
        %847 = vmatprep.subr.mxu0 0.0
        %848 = vmatpush1.msra.mxu0 %v829
        %849 = vmatprep.subr.mxu0 0.0
        %850 = vmatpush1.msra.mxu0 0.0
        %851 = vmatprep.subr.mxu0 0.0
        %852 = vmatpush1.msra.mxu0 0.0
        %853 = vmatprep.subr.mxu0 0.0
        %854 = vmatpush1.msra.mxu0 0.0
        %855 = vmatprep.subr.mxu0 0.0
        %856 = vmatpush1.msra.mxu0 0.0
        %857 = vmatprep.subr.mxu0 0.0
        %858 = vmatpush1.msra.mxu0 0.0
        %859 = vmatprep.subr.mxu0 0.0
        %860 = vmatpush1.msra.mxu0 0.0
        %861 = vmatprep.subr.mxu0 0.0
        %862 = vmatpush1.msra.mxu0 0.0
        %863 = vmatprep.subr.mxu0 0.0
        %864 = vmatpush1.msra.mxu0 0.0
        %865 = vmatprep.subr.mxu0 0.0
        %866 = vmatpush1.msra.mxu0 0.0
        %867 = vmatprep.subr.mxu0 0.0
        %868 = vmatpush1.msra.mxu0 0.0
        %869 = vmatprep.subr.mxu0 0.0
        %870 = vmatpush1.msra.mxu0 0.0
        %871 = vmatprep.subr.mxu0 0.0
        %872 = vmatpush1.msra.mxu0 0.0
        %873 = vmatprep.subr.mxu0 0.0
        %874 = vmatpush1.msra.mxu0 0.0
        %875 = vmatprep.subr.mxu0 0.0
        %876 = vmatpush1.msra.mxu0 0.0
        %877 = vmatprep.subr.mxu0 0.0
        %878 = vmatpush1.msra.mxu0 0.0
        %879 = vmatprep.subr.mxu0 0.0
        %880 = vmatpush1.msra.mxu0 0.0
        %881 = vmatprep.subr.mxu0 0.0
        %882 = vmatpush1.msra.mxu0 0.0
        %883 = vmatprep.subr.mxu0 0.0
        %884 = vmatpush1.msra.mxu0 0.0
        %885 = vmatprep.subr.mxu0 0.0
        %886 = vmatpush1.msra.mxu0 0.0
        %887 = vmatprep.subr.mxu0 0.0
        %888 = vmatpush1.msra.mxu0 0.0
        %889 = vmatprep.subr.mxu0 0.0
        %890 = vmatpush1.msra.mxu0 0.0
        %891 = vmatprep.subr.mxu0 0.0
        %892 = vmatpush1.msra.mxu0 0.0
        %893 = vmatprep.subr.mxu0 0.0
        %894 = vmatpush1.msra.mxu0 0.0
        %895 = vmatprep.subr.mxu0 0.0
        %896 = vmatpush1.msra.mxu0 0.0
        %897 = vmatprep.subr.mxu0 0.0
        %898 = vmatpush1.msra.mxu0 0.0
        %899 = vmatprep.subr.mxu0 0.0
        %900 = vmatpush1.msra.mxu0 0.0
        %901 = vmatprep.subr.mxu0 0.0
        %902 = vmatpush1.msra.mxu0 0.0
        %903 = vmatprep.subr.mxu0 0.0
        %904 = vmatpush1.msra.mxu0 0.0
        %905 = vmatprep.mubr.f32.mxu0 0.0
        %906 = vmatmul.mubr.f32.gmra.mrb[0].mxu0 %v839
        %v907 = vpop.f32.mrb[0].mxu0
        %v908 = vadd.f32 %v835, %v907
        %v909 = vpop.f32.mrb[0].mxu0
        %910 = vdwg.mxu0
        %v911 = vmul.f32 %v908, 0.35355338
        %913 = vrot.lane.b32.xlu0 %v911, 120
        %v914 = vpop.permute.xlu0 %913
        %916 = vrot.lane.b32.xlu0 %v911, 112
        %v917 = vpop.permute.xlu0 %916
        %919 = vrot.lane.b32.xlu0 %v911, 104
        %v920 = vpop.permute.xlu0 %919
        %v922 = vcombine.low %v911, %v917
        %v923 = vcombine.high %v911, %v917
        %v925 = vunpack.c.l.s4 1983009808
        %v926 = vunpack.c.0.s8 %v925
        %v927 = vlaneseq
        %v928 = vshrl.u32 %v927, 7
        %v929 = vsub.s32 %v926, %v928
        %v930 = vrot.slane %v922, %v929
        %v932 = vunpack.c.l.s4 1983009808
        %v933 = vunpack.c.0.s8 %v932
        %v934 = vlaneseq
        %v935 = vshrl.u32 %v934, 7
        %v936 = vsub.s32 %v933, %v935
        %v937 = vrot.slane %v923, %v936
        %v938 = vcombine.low %v914, %v920
        %v939 = vcombine.high %v914, %v920
        %v941 = vunpack.c.l.s4 1983009808
        %v942 = vunpack.c.0.s8 %v941
        %v943 = vlaneseq
        %v944 = vshrl.u32 %v943, 7
        %v945 = vsub.s32 %v942, %v944
        %v946 = vrot.slane %v938, %v945
        %v948 = vunpack.c.l.s4 1983009808
        %v949 = vunpack.c.0.s8 %v948
        %v950 = vlaneseq
        %v951 = vshrl.u32 %v950, 7
        %v952 = vsub.s32 %v949, %v951
        %v953 = vrot.slane %v939, %v952
        %v954 = vcombine.low %v930, %v946
        %v955 = vcombine.high %v930, %v946
        %v957 = vunpack.c.l.s4 1934713408
        %v958 = vunpack.c.0.s8 %v957
        %v959 = vlaneseq
        %v960 = vshrl.u32 %v959, 7
        %v961 = vsub.s32 %v958, %v960
        %v962 = vrot.slane %v954, %v961
        %v964 = vunpack.c.l.s4 1934713408
        %v965 = vunpack.c.0.s8 %v964
        %v966 = vlaneseq
        %v967 = vshrl.u32 %v966, 7
        %v968 = vsub.s32 %v965, %v967
        %v969 = vrot.slane %v955, %v968
        %v970 = vcombine.low %v937, %v953
        %v971 = vcombine.high %v937, %v953
        %v973 = vunpack.c.l.s4 1934713408
        %v974 = vunpack.c.0.s8 %v973
        %v975 = vlaneseq
        %v976 = vshrl.u32 %v975, 7
        %v977 = vsub.s32 %v974, %v976
        %v978 = vrot.slane %v970, %v977
        %v980 = vunpack.c.l.s4 1934713408
        %v981 = vunpack.c.0.s8 %v980
        %v982 = vlaneseq
        %v983 = vshrl.u32 %v982, 7
        %v984 = vsub.s32 %v981, %v983
        %v985 = vrot.slane %v971, %v984
        %v986 = vcombine.high %v962, 0.0
        %v987 = vcombine.high %v969, 0.0
        %v988 = vcombine.high %v978, 0.0
        %v989 = vcombine.high %v985, 0.0
        %v990 = vcombine.low %v962, %v969
        %v992 = vunpack.c.l.s4 1983009808
        %v993 = vunpack.c.0.s8 %v992
        %v994 = vlaneseq
        %v995 = vshrl.u32 %v994, 7
        %v996 = vsub.s32 %v993, %v995
        %v997 = vrot.slane %v990, %v996
        %v998 = vcombine.low %v986, %v987
        %v1000 = vunpack.c.l.s4 1983009808
        %v1001 = vunpack.c.0.s8 %v1000
        %v1002 = vlaneseq
        %v1003 = vshrl.u32 %v1002, 7
        %v1004 = vsub.s32 %v1001, %v1003
        %v1005 = vrot.slane %v998, %v1004
        %v1006 = vcombine.low %v978, %v985
        %v1008 = vunpack.c.l.s4 1983009808
        %v1009 = vunpack.c.0.s8 %v1008
        %v1010 = vlaneseq
        %v1011 = vshrl.u32 %v1010, 7
        %v1012 = vsub.s32 %v1009, %v1011
        %v1013 = vrot.slane %v1006, %v1012
        %v1014 = vcombine.low %v988, %v989
        %v1016 = vunpack.c.l.s4 1983009808
        %v1017 = vunpack.c.0.s8 %v1016
        %v1018 = vlaneseq
        %v1019 = vshrl.u32 %v1018, 7
        %v1020 = vsub.s32 %v1017, %v1019
        %v1021 = vrot.slane %v1014, %v1020
        %v1022 = vcombine.low %v997, %v1005
        %v1023 = vcombine.high %v997, %v1005
        %v1025 = vunpack.c.l.s4 1934713408
        %v1026 = vunpack.c.0.s8 %v1025
        %v1027 = vlaneseq
        %v1028 = vshrl.u32 %v1027, 7
        %v1029 = vsub.s32 %v1026, %v1028
        %v1030 = vrot.slane %v1022, %v1029
        %v1032 = vunpack.c.l.s4 1934713408
        %v1033 = vunpack.c.0.s8 %v1032
        %v1034 = vlaneseq
        %v1035 = vshrl.u32 %v1034, 7
        %v1036 = vsub.s32 %v1033, %v1035
        %v1037 = vrot.slane %v1023, %v1036
        %v1038 = vcombine.low %v1013, %v1021
        %v1039 = vcombine.high %v1013, %v1021
        %v1041 = vunpack.c.l.s4 1934713408
        %v1042 = vunpack.c.0.s8 %v1041
        %v1043 = vlaneseq
        %v1044 = vshrl.u32 %v1043, 7
        %v1045 = vsub.s32 %v1042, %v1044
        %v1046 = vrot.slane %v1038, %v1045
        %v1048 = vunpack.c.l.s4 1934713408
        %v1049 = vunpack.c.0.s8 %v1048
        %v1050 = vlaneseq
        %v1051 = vshrl.u32 %v1050, 7
        %v1052 = vsub.s32 %v1049, %v1051
        %v1053 = vrot.slane %v1039, %v1052
        %v1054 = vcombine.low %v1030, %v1046
        %v1055 = vcombine.high %v1030, %v1046
        %v1056 = vcombine.low %v1037, %v1053
        %v1057 = vcombine.high %v1037, %v1053
        %vm1058 = vcmask 7168
        %1059 = vst.msk [vmem:[#allocation4] sm:$0xff] %vm1058, -inf
        %1060 = vst.msk [vmem:[#allocation4 + $0x8] sm:$0xff] %vm1058, -inf
        %1061 = vst.msk [vmem:[#allocation4 + $0x10] sm:$0xff] %vm1058, -inf
        %1062 = vst.msk [vmem:[#allocation4 + $0x18] sm:$0xff] %vm1058, -inf
        %1063 = vst.msk [vmem:[#allocation5] sm:$0xff] %vm1058, 0.0
        %1064 = vst.msk [vmem:[#allocation5 + $0x8] sm:$0xff] %vm1058, 0.0
        %1065 = vst.msk [vmem:[#allocation5 + $0x10] sm:$0xff] %vm1058, 0.0
        %1066 = vst.msk [vmem:[#allocation5 + $0x18] sm:$0xff] %vm1058, 0.0
        %vm1067 = vcmask 64512
        %1068 = vst.msk [vmem:[#allocation6] sm:$0xff] %vm1067, 0.0
        %1069 = vst.msk [vmem:[#allocation6 + $0x8] sm:$0xff] %vm1067, 0.0
        %1070 = vst.msk [vmem:[#allocation6 + $0x10] sm:$0xff] %vm1067, 0.0
        %1071 = vst.msk [vmem:[#allocation6 + $0x18] sm:$0xff] %vm1067, 0.0
        %s1072 = sadd.s32 %s37, 1
        // While loop
        $region81: #{tpu_custom_call.1} parent=47 // loop_pre_header
          _
        $region82: #{tpu_custom_call.1} parent=47 // loop_header
          %s1074 = sphi 0, %s1076
          %p1075 = scmp.ge.s32.totalorder %s1074, %s1072
        $region83: #{tpu_custom_call.1} parent=47 // loop_header_branch
          %1078 = sbr.rel (%p1075) target = $region87
        $region84: #{tpu_custom_call.1} parent=47 // loop_body
          %s1079 = smul.u32 %s1074, 8
          %s1080 = scalar_lea.vmem [#allocation2], %s1079
          %v1081 = vld [vmem:[%s1080] sm:$0xff]
          %v1082 = vld [vmem:[%s1080 + $0x8] sm:$0xff]
          %v1083 = vld [vmem:[%s1080 + $0x10] sm:$0xff]
          %v1084 = vld [vmem:[%s1080 + $0x18] sm:$0xff]
          %s1085 = scalar_lea.vmem [#allocation3], %s1079
          %v1086 = vld [vmem:[%s1085] sm:$0xff]
          %v1087 = vld [vmem:[%s1085 + $0x8] sm:$0xff]
          %v1088 = vld [vmem:[%s1085 + $0x10] sm:$0xff]
          %v1089 = vld [vmem:[%s1085 + $0x18] sm:$0xff]
          %v1091 = vsel %vm1067, %v1054, 0
          %v1094 = vsel %vm1067, %v1081, 0
          %1096 = vmatprep.subr.mxu0 0.0
          %1097 = vmatpush1.xpose.msra.mxu0 %v1094
          %1098 = vmatprep.subr.mxu0 0.0
          %1099 = vmatpush1.xpose.msra.mxu0 0.0
          %1100 = vmatprep.subr.mxu0 0.0
          %1101 = vmatpush1.xpose.msra.mxu0 0.0
          %1102 = vmatprep.subr.mxu0 0.0
          %1103 = vmatpush1.xpose.msra.mxu0 0.0
          %1104 = vmatprep.subr.mxu0 0.0
          %1105 = vmatpush1.xpose.msra.mxu0 0.0
          %1106 = vmatprep.subr.mxu0 0.0
          %1107 = vmatpush1.xpose.msra.mxu0 0.0
          %1108 = vmatprep.subr.mxu0 0.0
          %1109 = vmatpush1.xpose.msra.mxu0 0.0
          %1110 = vmatprep.subr.mxu0 0.0
          %1111 = vmatpush1.xpose.msra.mxu0 0.0
          %1112 = vmatprep.subr.mxu0 0.0
          %1113 = vmatpush1.xpose.msra.mxu0 0.0
          %1114 = vmatprep.subr.mxu0 0.0
          %1115 = vmatpush1.xpose.msra.mxu0 0.0
          %1116 = vmatprep.subr.mxu0 0.0
          %1117 = vmatpush1.xpose.msra.mxu0 0.0
          %1118 = vmatprep.subr.mxu0 0.0
          %1119 = vmatpush1.xpose.msra.mxu0 0.0
          %1120 = vmatprep.subr.mxu0 0.0
          %1121 = vmatpush1.xpose.msra.mxu0 0.0
          %1122 = vmatprep.subr.mxu0 0.0
          %1123 = vmatpush1.xpose.msra.mxu0 0.0
          %1124 = vmatprep.subr.mxu0 0.0
          %1125 = vmatpush1.xpose.msra.mxu0 0.0
          %1126 = vmatprep.subr.mxu0 0.0
          %1127 = vmatpush1.xpose.msra.mxu0 0.0
          %1128 = vmatprep.subr.mxu0 0.0
          %1129 = vmatpush1.xpose.msra.mxu0 0.0
          %1130 = vmatprep.subr.mxu0 0.0
          %1131 = vmatpush1.xpose.msra.mxu0 0.0
          %1132 = vmatprep.subr.mxu0 0.0
          %1133 = vmatpush1.xpose.msra.mxu0 0.0
          %1134 = vmatprep.subr.mxu0 0.0
          %1135 = vmatpush1.xpose.msra.mxu0 0.0
          %1136 = vmatprep.subr.mxu0 0.0
          %1137 = vmatpush1.xpose.msra.mxu0 0.0
          %1138 = vmatprep.subr.mxu0 0.0
          %1139 = vmatpush1.xpose.msra.mxu0 0.0
          %1140 = vmatprep.subr.mxu0 0.0
          %1141 = vmatpush1.xpose.msra.mxu0 0.0
          %1142 = vmatprep.subr.mxu0 0.0
          %1143 = vmatpush1.xpose.msra.mxu0 0.0
          %1144 = vmatprep.subr.mxu0 0.0
          %1145 = vmatpush1.xpose.msra.mxu0 0.0
          %1146 = vmatprep.subr.mxu0 0.0
          %1147 = vmatpush1.xpose.msra.mxu0 0.0
          %1148 = vmatprep.subr.mxu0 0.0
          %1149 = vmatpush1.xpose.msra.mxu0 0.0
          %1150 = vmatprep.subr.mxu0 0.0
          %1151 = vmatpush1.xpose.msra.mxu0 0.0
          %1152 = vmatprep.subr.mxu0 0.0
          %1153 = vmatpush1.xpose.msra.mxu0 0.0
          %1154 = vmatprep.subr.mxu0 0.0
          %1155 = vmatpush1.xpose.msra.mxu0 0.0
          %1156 = vmatprep.subr.mxu0 0.0
          %1157 = vmatpush1.xpose.msra.mxu0 0.0
          %1158 = vmatprep.subr.mxu0 0.0
          %1159 = vmatpush1.xpose.msra.mxu0 0.0
          %1160 = vmatprep.mubr.f32.mxu0 0.0
          %1161 = vmatmul.mubr.f32.gmra.mrb[0].mxu0 %v1091
          %v1162 = vpop.f32.mrb[0].mxu0
          %v1163 = vadd.f32 0.0, %v1162
          %v1164 = vpop.f32.mrb[0].mxu0
          %1165 = vdwg.mxu0
          %v1167 = vsel %vm1067, %v1055, 0
          %v1170 = vsel %vm1067, %v1082, 0
          %1172 = vmatprep.subr.mxu0 0.0
          %1173 = vmatpush1.xpose.msra.mxu0 %v1170
          %1174 = vmatprep.subr.mxu0 0.0
          %1175 = vmatpush1.xpose.msra.mxu0 0.0
          %1176 = vmatprep.subr.mxu0 0.0
          %1177 = vmatpush1.xpose.msra.mxu0 0.0
          %1178 = vmatprep.subr.mxu0 0.0
          %1179 = vmatpush1.xpose.msra.mxu0 0.0
          %1180 = vmatprep.subr.mxu0 0.0
          %1181 = vmatpush1.xpose.msra.mxu0 0.0
          %1182 = vmatprep.subr.mxu0 0.0
          %1183 = vmatpush1.xpose.msra.mxu0 0.0
          %1184 = vmatprep.subr.mxu0 0.0
          %1185 = vmatpush1.xpose.msra.mxu0 0.0
          %1186 = vmatprep.subr.mxu0 0.0
          %1187 = vmatpush1.xpose.msra.mxu0 0.0
          %1188 = vmatprep.subr.mxu0 0.0
          %1189 = vmatpush1.xpose.msra.mxu0 0.0
          %1190 = vmatprep.subr.mxu0 0.0
          %1191 = vmatpush1.xpose.msra.mxu0 0.0
          %1192 = vmatprep.subr.mxu0 0.0
          %1193 = vmatpush1.xpose.msra.mxu0 0.0
          %1194 = vmatprep.subr.mxu0 0.0
          %1195 = vmatpush1.xpose.msra.mxu0 0.0
          %1196 = vmatprep.subr.mxu0 0.0
          %1197 = vmatpush1.xpose.msra.mxu0 0.0
          %1198 = vmatprep.subr.mxu0 0.0
          %1199 = vmatpush1.xpose.msra.mxu0 0.0
          %1200 = vmatprep.subr.mxu0 0.0
          %1201 = vmatpush1.xpose.msra.mxu0 0.0
          %1202 = vmatprep.subr.mxu0 0.0
          %1203 = vmatpush1.xpose.msra.mxu0 0.0
          %1204 = vmatprep.subr.mxu0 0.0
          %1205 = vmatpush1.xpose.msra.mxu0 0.0
          %1206 = vmatprep.subr.mxu0 0.0
          %1207 = vmatpush1.xpose.msra.mxu0 0.0
          %1208 = vmatprep.subr.mxu0 0.0
          %1209 = vmatpush1.xpose.msra.mxu0 0.0
          %1210 = vmatprep.subr.mxu0 0.0
          %1211 = vmatpush1.xpose.msra.mxu0 0.0
          %1212 = vmatprep.subr.mxu0 0.0
          %1213 = vmatpush1.xpose.msra.mxu0 0.0
          %1214 = vmatprep.subr.mxu0 0.0
          %1215 = vmatpush1.xpose.msra.mxu0 0.0
          %1216 = vmatprep.subr.mxu0 0.0
          %1217 = vmatpush1.xpose.msra.mxu0 0.0
          %1218 = vmatprep.subr.mxu0 0.0
          %1219 = vmatpush1.xpose.msra.mxu0 0.0
          %1220 = vmatprep.subr.mxu0 0.0
          %1221 = vmatpush1.xpose.msra.mxu0 0.0
          %1222 = vmatprep.subr.mxu0 0.0
          %1223 = vmatpush1.xpose.msra.mxu0 0.0
          %1224 = vmatprep.subr.mxu0 0.0
          %1225 = vmatpush1.xpose.msra.mxu0 0.0
          %1226 = vmatprep.subr.mxu0 0.0
          %1227 = vmatpush1.xpose.msra.mxu0 0.0
          %1228 = vmatprep.subr.mxu0 0.0
          %1229 = vmatpush1.xpose.msra.mxu0 0.0
          %1230 = vmatprep.subr.mxu0 0.0
          %1231 = vmatpush1.xpose.msra.mxu0 0.0
          %1232 = vmatprep.subr.mxu0 0.0
          %1233 = vmatpush1.xpose.msra.mxu0 0.0
          %1234 = vmatprep.subr.mxu0 0.0
          %1235 = vmatpush1.xpose.msra.mxu0 0.0
          %1236 = vmatprep.mubr.f32.mxu0 0.0
          %1237 = vmatmul.mubr.f32.gmra.mrb[0].mxu0 %v1167
          %v1238 = vpop.f32.mrb[0].mxu0
          %v1239 = vadd.f32 0.0, %v1238
          %v1240 = vpop.f32.mrb[0].mxu0
          %1241 = vdwg.mxu0
          %v1243 = vsel %vm1067, %v1056, 0
          %v1246 = vsel %vm1067, %v1083, 0
          %1248 = vmatprep.subr.mxu0 0.0
          %1249 = vmatpush1.xpose.msra.mxu0 %v1246
          %1250 = vmatprep.subr.mxu0 0.0
          %1251 = vmatpush1.xpose.msra.mxu0 0.0
          %1252 = vmatprep.subr.mxu0 0.0
          %1253 = vmatpush1.xpose.msra.mxu0 0.0
          %1254 = vmatprep.subr.mxu0 0.0
          %1255 = vmatpush1.xpose.msra.mxu0 0.0
          %1256 = vmatprep.subr.mxu0 0.0
          %1257 = vmatpush1.xpose.msra.mxu0 0.0
          %1258 = vmatprep.subr.mxu0 0.0
          %1259 = vmatpush1.xpose.msra.mxu0 0.0
          %1260 = vmatprep.subr.mxu0 0.0
          %1261 = vmatpush1.xpose.msra.mxu0 0.0
          %1262 = vmatprep.subr.mxu0 0.0
          %1263 = vmatpush1.xpose.msra.mxu0 0.0
          %1264 = vmatprep.subr.mxu0 0.0
          %1265 = vmatpush1.xpose.msra.mxu0 0.0
          %1266 = vmatprep.subr.mxu0 0.0
          %1267 = vmatpush1.xpose.msra.mxu0 0.0
          %1268 = vmatprep.subr.mxu0 0.0
          %1269 = vmatpush1.xpose.msra.mxu0 0.0
          %1270 = vmatprep.subr.mxu0 0.0
          %1271 = vmatpush1.xpose.msra.mxu0 0.0
          %1272 = vmatprep.subr.mxu0 0.0
          %1273 = vmatpush1.xpose.msra.mxu0 0.0
          %1274 = vmatprep.subr.mxu0 0.0
          %1275 = vmatpush1.xpose.msra.mxu0 0.0
          %1276 = vmatprep.subr.mxu0 0.0
          %1277 = vmatpush1.xpose.msra.mxu0 0.0
          %1278 = vmatprep.subr.mxu0 0.0
          %1279 = vmatpush1.xpose.msra.mxu0 0.0
          %1280 = vmatprep.subr.mxu0 0.0
          %1281 = vmatpush1.xpose.msra.mxu0 0.0
          %1282 = vmatprep.subr.mxu0 0.0
          %1283 = vmatpush1.xpose.msra.mxu0 0.0
          %1284 = vmatprep.subr.mxu0 0.0
          %1285 = vmatpush1.xpose.msra.mxu0 0.0
          %1286 = vmatprep.subr.mxu0 0.0
          %1287 = vmatpush1.xpose.msra.mxu0 0.0
          %1288 = vmatprep.subr.mxu0 0.0
          %1289 = vmatpush1.xpose.msra.mxu0 0.0
          %1290 = vmatprep.subr.mxu0 0.0
          %1291 = vmatpush1.xpose.msra.mxu0 0.0
          %1292 = vmatprep.subr.mxu0 0.0
          %1293 = vmatpush1.xpose.msra.mxu0 0.0
          %1294 = vmatprep.subr.mxu0 0.0
          %1295 = vmatpush1.xpose.msra.mxu0 0.0
          %1296 = vmatprep.subr.mxu0 0.0
          %1297 = vmatpush1.xpose.msra.mxu0 0.0
          %1298 = vmatprep.subr.mxu0 0.0
          %1299 = vmatpush1.xpose.msra.mxu0 0.0
          %1300 = vmatprep.subr.mxu0 0.0
          %1301 = vmatpush1.xpose.msra.mxu0 0.0
          %1302 = vmatprep.subr.mxu0 0.0
          %1303 = vmatpush1.xpose.msra.mxu0 0.0
          %1304 = vmatprep.subr.mxu0 0.0
          %1305 = vmatpush1.xpose.msra.mxu0 0.0
          %1306 = vmatprep.subr.mxu0 0.0
          %1307 = vmatpush1.xpose.msra.mxu0 0.0
          %1308 = vmatprep.subr.mxu0 0.0
          %1309 = vmatpush1.xpose.msra.mxu0 0.0
          %1310 = vmatprep.subr.mxu0 0.0
          %1311 = vmatpush1.xpose.msra.mxu0 0.0
          %1312 = vmatprep.mubr.f32.mxu0 0.0
          %1313 = vmatmul.mubr.f32.gmra.mrb[0].mxu0 %v1243
          %v1314 = vpop.f32.mrb[0].mxu0
          %v1315 = vadd.f32 0.0, %v1314
          %v1316 = vpop.f32.mrb[0].mxu0
          %1317 = vdwg.mxu0
          %v1319 = vsel %vm1067, %v1057, 0
          %v1322 = vsel %vm1067, %v1084, 0
          %1324 = vmatprep.subr.mxu0 0.0
          %1325 = vmatpush1.xpose.msra.mxu0 %v1322
          %1326 = vmatprep.subr.mxu0 0.0
          %1327 = vmatpush1.xpose.msra.mxu0 0.0
          %1328 = vmatprep.subr.mxu0 0.0
          %1329 = vmatpush1.xpose.msra.mxu0 0.0
          %1330 = vmatprep.subr.mxu0 0.0
          %1331 = vmatpush1.xpose.msra.mxu0 0.0
          %1332 = vmatprep.subr.mxu0 0.0
          %1333 = vmatpush1.xpose.msra.mxu0 0.0
          %1334 = vmatprep.subr.mxu0 0.0
          %1335 = vmatpush1.xpose.msra.mxu0 0.0
          %1336 = vmatprep.subr.mxu0 0.0
          %1337 = vmatpush1.xpose.msra.mxu0 0.0
          %1338 = vmatprep.subr.mxu0 0.0
          %1339 = vmatpush1.xpose.msra.mxu0 0.0
          %1340 = vmatprep.subr.mxu0 0.0
          %1341 = vmatpush1.xpose.msra.mxu0 0.0
          %1342 = vmatprep.subr.mxu0 0.0
          %1343 = vmatpush1.xpose.msra.mxu0 0.0
          %1344 = vmatprep.subr.mxu0 0.0
          %1345 = vmatpush1.xpose.msra.mxu0 0.0
          %1346 = vmatprep.subr.mxu0 0.0
          %1347 = vmatpush1.xpose.msra.mxu0 0.0
          %1348 = vmatprep.subr.mxu0 0.0
          %1349 = vmatpush1.xpose.msra.mxu0 0.0
          %1350 = vmatprep.subr.mxu0 0.0
          %1351 = vmatpush1.xpose.msra.mxu0 0.0
          %1352 = vmatprep.subr.mxu0 0.0
          %1353 = vmatpush1.xpose.msra.mxu0 0.0
          %1354 = vmatprep.subr.mxu0 0.0
          %1355 = vmatpush1.xpose.msra.mxu0 0.0
          %1356 = vmatprep.subr.mxu0 0.0
          %1357 = vmatpush1.xpose.msra.mxu0 0.0
          %1358 = vmatprep.subr.mxu0 0.0
          %1359 = vmatpush1.xpose.msra.mxu0 0.0
          %1360 = vmatprep.subr.mxu0 0.0
          %1361 = vmatpush1.xpose.msra.mxu0 0.0
          %1362 = vmatprep.subr.mxu0 0.0
          %1363 = vmatpush1.xpose.msra.mxu0 0.0
          %1364 = vmatprep.subr.mxu0 0.0
          %1365 = vmatpush1.xpose.msra.mxu0 0.0
          %1366 = vmatprep.subr.mxu0 0.0
          %1367 = vmatpush1.xpose.msra.mxu0 0.0
          %1368 = vmatprep.subr.mxu0 0.0
          %1369 = vmatpush1.xpose.msra.mxu0 0.0
          %1370 = vmatprep.subr.mxu0 0.0
          %1371 = vmatpush1.xpose.msra.mxu0 0.0
          %1372 = vmatprep.subr.mxu0 0.0
          %1373 = vmatpush1.xpose.msra.mxu0 0.0
          %1374 = vmatprep.subr.mxu0 0.0
          %1375 = vmatpush1.xpose.msra.mxu0 0.0
          %1376 = vmatprep.subr.mxu0 0.0
          %1377 = vmatpush1.xpose.msra.mxu0 0.0
          %1378 = vmatprep.subr.mxu0 0.0
          %1379 = vmatpush1.xpose.msra.mxu0 0.0
          %1380 = vmatprep.subr.mxu0 0.0
          %1381 = vmatpush1.xpose.msra.mxu0 0.0
          %1382 = vmatprep.subr.mxu0 0.0
          %1383 = vmatpush1.xpose.msra.mxu0 0.0
          %1384 = vmatprep.subr.mxu0 0.0
          %1385 = vmatpush1.xpose.msra.mxu0 0.0
          %1386 = vmatprep.subr.mxu0 0.0
          %1387 = vmatpush1.xpose.msra.mxu0 0.0
          %1388 = vmatprep.mubr.f32.mxu0 0.0
          %1389 = vmatmul.mubr.f32.gmra.mrb[0].mxu0 %v1319
          %v1390 = vpop.f32.mrb[0].mxu0
          %v1391 = vadd.f32 0.0, %v1390
          %v1392 = vpop.f32.mrb[0].mxu0
          %1393 = vdwg.mxu0
          %v1394 = vlaneseq
          %v1395 = vshrl.u32 %v1394, 7
          %v1396 = vstv %s823
          %v1397 = vadd.s32 %v1396, %v1395
          %v1398 = vlaneseq
          %v1399 = vand.u32 %v1398, 127
          %v1400 = vstv %s1079
          %v1401 = vadd.s32 %v1400, %v1399
          %vm1402 = vcmp.ge.s32.totalorder %v1397, %v1401
          %v1403 = vsel %vm1402, 1, 0
          %vm1404 = vcmp.eq.s32.totalorder %v1403, 1
          %v1405 = vsel %vm1404, %v1163, -1e+10
          %v1406 = vsel %vm1404, %v1239, -1e+10
          %v1407 = vsel %vm1404, %v1315, -1e+10
          %v1408 = vsel %vm1404, %v1391, -1e+10
          %v1409 = vld [vmem:[#allocation4] sm:$0xff]
          %v1410 = vld [vmem:[#allocation4 + $0x8] sm:$0xff]
          %v1411 = vld [vmem:[#allocation4 + $0x10] sm:$0xff]
          %v1412 = vld [vmem:[#allocation4 + $0x18] sm:$0xff]
          %v1413 = vsel %vm1067, %v1405, -inf
          %1414 = vmax.xlane.f32.xlu0 %v1413
          %v1415 = vpop.xlane.xlu0 %1414
          %v1416 = vsel %vm1067, %v1406, -inf
          %1417 = vmax.xlane.f32.xlu0 %v1416
          %v1418 = vpop.xlane.xlu0 %1417
          %v1419 = vsel %vm1067, %v1407, -inf
          %1420 = vmax.xlane.f32.xlu0 %v1419
          %v1421 = vpop.xlane.xlu0 %1420
          %v1422 = vsel %vm1067, %v1408, -inf
          %1423 = vmax.xlane.f32.xlu0 %v1422
          %v1424 = vpop.xlane.xlu0 %1423
          %v1425 = vmax.f32 %v1409, %v1415
          %v1426 = vmax.f32 %v1410, %v1418
          %v1427 = vmax.f32 %v1411, %v1421
          %v1428 = vmax.f32 %v1412, %v1424
          %v1429 = vsub.f32 %v1409, %v1425
          %v1430 = vsub.f32 %v1410, %v1426
          %v1431 = vsub.f32 %v1411, %v1427
          %v1432 = vsub.f32 %v1412, %v1428
          %v1433 = vmul.f32 %v1429, 1.442695
          %v1434 = vpow.pop %v1433
          %v1435 = vmul.f32 %v1430, 1.442695
          %v1436 = vpow.pop %v1435
          %v1437 = vmul.f32 %v1431, 1.442695
          %v1438 = vpow.pop %v1437
          %v1439 = vmul.f32 %v1432, 1.442695
          %v1440 = vpow.pop %v1439
          %1442 = vset.pattern.permute.xlu0 0
          %1443 = vperm.xlu0 %1442, %v1425
          %v1444 = vpop.permute.xlu0 %1443
          %1447 = vset.pattern.permute.xlu0 0
          %1448 = vperm.xlu0 %1447, %v1426
          %v1449 = vpop.permute.xlu0 %1448
          %1452 = vset.pattern.permute.xlu0 0
          %1453 = vperm.xlu0 %1452, %v1427
          %v1454 = vpop.permute.xlu0 %1453
          %1457 = vset.pattern.permute.xlu0 0
          %1458 = vperm.xlu0 %1457, %v1428
          %v1459 = vpop.permute.xlu0 %1458
          %v1461 = vsub.f32 %v1405, %v1444
          %v1462 = vsub.f32 %v1406, %v1449
          %v1463 = vsub.f32 %v1407, %v1454
          %v1464 = vsub.f32 %v1408, %v1459
          %v1465 = vmul.f32 %v1461, 1.442695
          %v1466 = vpow.pop %v1465
          %v1467 = vmul.f32 %v1462, 1.442695
          %v1468 = vpow.pop %v1467
          %v1469 = vmul.f32 %v1463, 1.442695
          %v1470 = vpow.pop %v1469
          %v1471 = vmul.f32 %v1464, 1.442695
          %v1472 = vpow.pop %v1471
          %v1473 = vld [vmem:[#allocation5] sm:$0xff]
          %v1474 = vld [vmem:[#allocation5 + $0x8] sm:$0xff]
          %v1475 = vld [vmem:[#allocation5 + $0x10] sm:$0xff]
          %v1476 = vld [vmem:[#allocation5 + $0x18] sm:$0xff]
          %v1477 = vmul.f32 %v1434, %v1473
          %v1478 = vmul.f32 %v1436, %v1474
          %v1479 = vmul.f32 %v1438, %v1475
          %v1480 = vmul.f32 %v1440, %v1476
          %v1481 = vsel %vm1067, %v1466, 0.0
          %1482 = vadd.xlane.f32.xlu0 %v1481
          %v1483 = vpop.xlane.xlu0 %1482
          %v1484 = vsel %vm1067, %v1468, 0.0
          %1485 = vadd.xlane.f32.xlu0 %v1484
          %v1486 = vpop.xlane.xlu0 %1485
          %v1487 = vsel %vm1067, %v1470, 0.0
          %1488 = vadd.xlane.f32.xlu0 %v1487
          %v1489 = vpop.xlane.xlu0 %1488
          %v1490 = vsel %vm1067, %v1472, 0.0
          %1491 = vadd.xlane.f32.xlu0 %v1490
          %v1492 = vpop.xlane.xlu0 %1491
          %v1493 = vadd.f32 %v1477, %v1483
          %v1494 = vadd.f32 %v1478, %v1486
          %v1495 = vadd.f32 %v1479, %v1489
          %v1496 = vadd.f32 %v1480, %v1492
          %1497 = vst.msk [vmem:[#allocation5] sm:$0xff] %vm1058, %v1493
          %1498 = vst.msk [vmem:[#allocation5 + $0x8] sm:$0xff] %vm1058, %v1494
          %1499 = vst.msk [vmem:[#allocation5 + $0x10] sm:$0xff] %vm1058, %v1495
          %1500 = vst.msk [vmem:[#allocation5 + $0x18] sm:$0xff] %vm1058, %v1496
          %v1502 = vsel %vm1067, %v1466, 0
          %1504 = vmatprep.subr.mxu0 0.0
          %1505 = vmatpush1.msra.mxu0 %v1086
          %1506 = vmatprep.subr.mxu0 0.0
          %1507 = vmatpush1.msra.mxu0 0.0
          %1508 = vmatprep.subr.mxu0 0.0
          %1509 = vmatpush1.msra.mxu0 0.0
          %1510 = vmatprep.subr.mxu0 0.0
          %1511 = vmatpush1.msra.mxu0 0.0
          %1512 = vmatprep.subr.mxu0 0.0
          %1513 = vmatpush1.msra.mxu0 0.0
          %1514 = vmatprep.subr.mxu0 0.0
          %1515 = vmatpush1.msra.mxu0 0.0
          %1516 = vmatprep.subr.mxu0 0.0
          %1517 = vmatpush1.msra.mxu0 0.0
          %1518 = vmatprep.subr.mxu0 0.0
          %1519 = vmatpush1.msra.mxu0 0.0
          %1520 = vmatprep.subr.mxu0 0.0
          %1521 = vmatpush1.msra.mxu0 0.0
          %1522 = vmatprep.subr.mxu0 0.0
          %1523 = vmatpush1.msra.mxu0 0.0
          %1524 = vmatprep.subr.mxu0 0.0
          %1525 = vmatpush1.msra.mxu0 0.0
          %1526 = vmatprep.subr.mxu0 0.0
          %1527 = vmatpush1.msra.mxu0 0.0
          %1528 = vmatprep.subr.mxu0 0.0
          %1529 = vmatpush1.msra.mxu0 0.0
          %1530 = vmatprep.subr.mxu0 0.0
          %1531 = vmatpush1.msra.mxu0 0.0
          %1532 = vmatprep.subr.mxu0 0.0
          %1533 = vmatpush1.msra.mxu0 0.0
          %1534 = vmatprep.subr.mxu0 0.0
          %1535 = vmatpush1.msra.mxu0 0.0
          %1536 = vmatprep.subr.mxu0 0.0
          %1537 = vmatpush1.msra.mxu0 0.0
          %1538 = vmatprep.subr.mxu0 0.0
          %1539 = vmatpush1.msra.mxu0 0.0
          %1540 = vmatprep.subr.mxu0 0.0
          %1541 = vmatpush1.msra.mxu0 0.0
          %1542 = vmatprep.subr.mxu0 0.0
          %1543 = vmatpush1.msra.mxu0 0.0
          %1544 = vmatprep.subr.mxu0 0.0
          %1545 = vmatpush1.msra.mxu0 0.0
          %1546 = vmatprep.subr.mxu0 0.0
          %1547 = vmatpush1.msra.mxu0 0.0
          %1548 = vmatprep.subr.mxu0 0.0
          %1549 = vmatpush1.msra.mxu0 0.0
          %1550 = vmatprep.subr.mxu0 0.0
          %1551 = vmatpush1.msra.mxu0 0.0
          %1552 = vmatprep.subr.mxu0 0.0
          %1553 = vmatpush1.msra.mxu0 0.0
          %1554 = vmatprep.subr.mxu0 0.0
          %1555 = vmatpush1.msra.mxu0 0.0
          %1556 = vmatprep.subr.mxu0 0.0
          %1557 = vmatpush1.msra.mxu0 0.0
          %1558 = vmatprep.subr.mxu0 0.0
          %1559 = vmatpush1.msra.mxu0 0.0
          %1560 = vmatprep.subr.mxu0 0.0
          %1561 = vmatpush1.msra.mxu0 0.0
          %1562 = vmatprep.subr.mxu0 0.0
          %1563 = vmatpush1.msra.mxu0 0.0
          %1564 = vmatprep.subr.mxu0 0.0
          %1565 = vmatpush1.msra.mxu0 0.0
          %1566 = vmatprep.subr.mxu0 0.0
          %1567 = vmatpush1.msra.mxu0 0.0
          %1568 = vmatprep.mubr.f32.mxu0 0.0
          %1569 = vmatmul.mubr.f32.gmra.mrb[0].mxu0 %v1502
          %v1570 = vpop.f32.mrb[0].mxu0
          %v1571 = vadd.f32 0.0, %v1570
          %v1572 = vpop.f32.mrb[0].mxu0
          %1573 = vdwg.mxu0
          %v1575 = vsel %vm1067, %v1468, 0
          %1577 = vmatprep.subr.mxu0 0.0
          %1578 = vmatpush1.msra.mxu0 %v1087
          %1579 = vmatprep.subr.mxu0 0.0
          %1580 = vmatpush1.msra.mxu0 0.0
          %1581 = vmatprep.subr.mxu0 0.0
          %1582 = vmatpush1.msra.mxu0 0.0
          %1583 = vmatprep.subr.mxu0 0.0
          %1584 = vmatpush1.msra.mxu0 0.0
          %1585 = vmatprep.subr.mxu0 0.0
          %1586 = vmatpush1.msra.mxu0 0.0
          %1587 = vmatprep.subr.mxu0 0.0
          %1588 = vmatpush1.msra.mxu0 0.0
          %1589 = vmatprep.subr.mxu0 0.0
          %1590 = vmatpush1.msra.mxu0 0.0
          %1591 = vmatprep.subr.mxu0 0.0
          %1592 = vmatpush1.msra.mxu0 0.0
          %1593 = vmatprep.subr.mxu0 0.0
          %1594 = vmatpush1.msra.mxu0 0.0
          %1595 = vmatprep.subr.mxu0 0.0
          %1596 = vmatpush1.msra.mxu0 0.0
          %1597 = vmatprep.subr.mxu0 0.0
          %1598 = vmatpush1.msra.mxu0 0.0
          %1599 = vmatprep.subr.mxu0 0.0
          %1600 = vmatpush1.msra.mxu0 0.0
          %1601 = vmatprep.subr.mxu0 0.0
          %1602 = vmatpush1.msra.mxu0 0.0
          %1603 = vmatprep.subr.mxu0 0.0
          %1604 = vmatpush1.msra.mxu0 0.0
          %1605 = vmatprep.subr.mxu0 0.0
          %1606 = vmatpush1.msra.mxu0 0.0
          %1607 = vmatprep.subr.mxu0 0.0
          %1608 = vmatpush1.msra.mxu0 0.0
          %1609 = vmatprep.subr.mxu0 0.0
          %1610 = vmatpush1.msra.mxu0 0.0
          %1611 = vmatprep.subr.mxu0 0.0
          %1612 = vmatpush1.msra.mxu0 0.0
          %1613 = vmatprep.subr.mxu0 0.0
          %1614 = vmatpush1.msra.mxu0 0.0
          %1615 = vmatprep.subr.mxu0 0.0
          %1616 = vmatpush1.msra.mxu0 0.0
          %1617 = vmatprep.subr.mxu0 0.0
          %1618 = vmatpush1.msra.mxu0 0.0
          %1619 = vmatprep.subr.mxu0 0.0
          %1620 = vmatpush1.msra.mxu0 0.0
          %1621 = vmatprep.subr.mxu0 0.0
          %1622 = vmatpush1.msra.mxu0 0.0
          %1623 = vmatprep.subr.mxu0 0.0
          %1624 = vmatpush1.msra.mxu0 0.0
          %1625 = vmatprep.subr.mxu0 0.0
          %1626 = vmatpush1.msra.mxu0 0.0
          %1627 = vmatprep.subr.mxu0 0.0
          %1628 = vmatpush1.msra.mxu0 0.0
          %1629 = vmatprep.subr.mxu0 0.0
          %1630 = vmatpush1.msra.mxu0 0.0
          %1631 = vmatprep.subr.mxu0 0.0
          %1632 = vmatpush1.msra.mxu0 0.0
          %1633 = vmatprep.subr.mxu0 0.0
          %1634 = vmatpush1.msra.mxu0 0.0
          %1635 = vmatprep.subr.mxu0 0.0
          %1636 = vmatpush1.msra.mxu0 0.0
          %1637 = vmatprep.subr.mxu0 0.0
          %1638 = vmatpush1.msra.mxu0 0.0
          %1639 = vmatprep.subr.mxu0 0.0
          %1640 = vmatpush1.msra.mxu0 0.0
          %1641 = vmatprep.mubr.f32.mxu0 0.0
          %1642 = vmatmul.mubr.f32.gmra.mrb[0].mxu0 %v1575
          %v1643 = vpop.f32.mrb[0].mxu0
          %v1644 = vadd.f32 0.0, %v1643
          %v1645 = vpop.f32.mrb[0].mxu0
          %1646 = vdwg.mxu0
          %v1648 = vsel %vm1067, %v1470, 0
          %1650 = vmatprep.subr.mxu0 0.0
          %1651 = vmatpush1.msra.mxu0 %v1088
          %1652 = vmatprep.subr.mxu0 0.0
          %1653 = vmatpush1.msra.mxu0 0.0
          %1654 = vmatprep.subr.mxu0 0.0
          %1655 = vmatpush1.msra.mxu0 0.0
          %1656 = vmatprep.subr.mxu0 0.0
          %1657 = vmatpush1.msra.mxu0 0.0
          %1658 = vmatprep.subr.mxu0 0.0
          %1659 = vmatpush1.msra.mxu0 0.0
          %1660 = vmatprep.subr.mxu0 0.0
          %1661 = vmatpush1.msra.mxu0 0.0
          %1662 = vmatprep.subr.mxu0 0.0
          %1663 = vmatpush1.msra.mxu0 0.0
          %1664 = vmatprep.subr.mxu0 0.0
          %1665 = vmatpush1.msra.mxu0 0.0
          %1666 = vmatprep.subr.mxu0 0.0
          %1667 = vmatpush1.msra.mxu0 0.0
          %1668 = vmatprep.subr.mxu0 0.0
          %1669 = vmatpush1.msra.mxu0 0.0
          %1670 = vmatprep.subr.mxu0 0.0
          %1671 = vmatpush1.msra.mxu0 0.0
          %1672 = vmatprep.subr.mxu0 0.0
          %1673 = vmatpush1.msra.mxu0 0.0
          %1674 = vmatprep.subr.mxu0 0.0
          %1675 = vmatpush1.msra.mxu0 0.0
          %1676 = vmatprep.subr.mxu0 0.0
          %1677 = vmatpush1.msra.mxu0 0.0
          %1678 = vmatprep.subr.mxu0 0.0
          %1679 = vmatpush1.msra.mxu0 0.0
          %1680 = vmatprep.subr.mxu0 0.0
          %1681 = vmatpush1.msra.mxu0 0.0
          %1682 = vmatprep.subr.mxu0 0.0
          %1683 = vmatpush1.msra.mxu0 0.0
          %1684 = vmatprep.subr.mxu0 0.0
          %1685 = vmatpush1.msra.mxu0 0.0
          %1686 = vmatprep.subr.mxu0 0.0
          %1687 = vmatpush1.msra.mxu0 0.0
          %1688 = vmatprep.subr.mxu0 0.0
          %1689 = vmatpush1.msra.mxu0 0.0
          %1690 = vmatprep.subr.mxu0 0.0
          %1691 = vmatpush1.msra.mxu0 0.0
          %1692 = vmatprep.subr.mxu0 0.0
          %1693 = vmatpush1.msra.mxu0 0.0
          %1694 = vmatprep.subr.mxu0 0.0
          %1695 = vmatpush1.msra.mxu0 0.0
          %1696 = vmatprep.subr.mxu0 0.0
          %1697 = vmatpush1.msra.mxu0 0.0
          %1698 = vmatprep.subr.mxu0 0.0
          %1699 = vmatpush1.msra.mxu0 0.0
          %1700 = vmatprep.subr.mxu0 0.0
          %1701 = vmatpush1.msra.mxu0 0.0
          %1702 = vmatprep.subr.mxu0 0.0
          %1703 = vmatpush1.msra.mxu0 0.0
          %1704 = vmatprep.subr.mxu0 0.0
          %1705 = vmatpush1.msra.mxu0 0.0
          %1706 = vmatprep.subr.mxu0 0.0
          %1707 = vmatpush1.msra.mxu0 0.0
          %1708 = vmatprep.subr.mxu0 0.0
          %1709 = vmatpush1.msra.mxu0 0.0
          %1710 = vmatprep.subr.mxu0 0.0
          %1711 = vmatpush1.msra.mxu0 0.0
          %1712 = vmatprep.subr.mxu0 0.0
          %1713 = vmatpush1.msra.mxu0 0.0
          %1714 = vmatprep.mubr.f32.mxu0 0.0
          %1715 = vmatmul.mubr.f32.gmra.mrb[0].mxu0 %v1648
          %v1716 = vpop.f32.mrb[0].mxu0
          %v1717 = vadd.f32 0.0, %v1716
          %v1718 = vpop.f32.mrb[0].mxu0
          %1719 = vdwg.mxu0
          %v1721 = vsel %vm1067, %v1472, 0
          %1723 = vmatprep.subr.mxu0 0.0
          %1724 = vmatpush1.msra.mxu0 %v1089
          %1725 = vmatprep.subr.mxu0 0.0
          %1726 = vmatpush1.msra.mxu0 0.0
          %1727 = vmatprep.subr.mxu0 0.0
          %1728 = vmatpush1.msra.mxu0 0.0
          %1729 = vmatprep.subr.mxu0 0.0
          %1730 = vmatpush1.msra.mxu0 0.0
          %1731 = vmatprep.subr.mxu0 0.0
          %1732 = vmatpush1.msra.mxu0 0.0
          %1733 = vmatprep.subr.mxu0 0.0
          %1734 = vmatpush1.msra.mxu0 0.0
          %1735 = vmatprep.subr.mxu0 0.0
          %1736 = vmatpush1.msra.mxu0 0.0
          %1737 = vmatprep.subr.mxu0 0.0
          %1738 = vmatpush1.msra.mxu0 0.0
          %1739 = vmatprep.subr.mxu0 0.0
          %1740 = vmatpush1.msra.mxu0 0.0
          %1741 = vmatprep.subr.mxu0 0.0
          %1742 = vmatpush1.msra.mxu0 0.0
          %1743 = vmatprep.subr.mxu0 0.0
          %1744 = vmatpush1.msra.mxu0 0.0
          %1745 = vmatprep.subr.mxu0 0.0
          %1746 = vmatpush1.msra.mxu0 0.0
          %1747 = vmatprep.subr.mxu0 0.0
          %1748 = vmatpush1.msra.mxu0 0.0
          %1749 = vmatprep.subr.mxu0 0.0
          %1750 = vmatpush1.msra.mxu0 0.0
          %1751 = vmatprep.subr.mxu0 0.0
          %1752 = vmatpush1.msra.mxu0 0.0
          %1753 = vmatprep.subr.mxu0 0.0
          %1754 = vmatpush1.msra.mxu0 0.0
          %1755 = vmatprep.subr.mxu0 0.0
          %1756 = vmatpush1.msra.mxu0 0.0
          %1757 = vmatprep.subr.mxu0 0.0
          %1758 = vmatpush1.msra.mxu0 0.0
          %1759 = vmatprep.subr.mxu0 0.0
          %1760 = vmatpush1.msra.mxu0 0.0
          %1761 = vmatprep.subr.mxu0 0.0
          %1762 = vmatpush1.msra.mxu0 0.0
          %1763 = vmatprep.subr.mxu0 0.0
          %1764 = vmatpush1.msra.mxu0 0.0
          %1765 = vmatprep.subr.mxu0 0.0
          %1766 = vmatpush1.msra.mxu0 0.0
          %1767 = vmatprep.subr.mxu0 0.0
          %1768 = vmatpush1.msra.mxu0 0.0
          %1769 = vmatprep.subr.mxu0 0.0
          %1770 = vmatpush1.msra.mxu0 0.0
          %1771 = vmatprep.subr.mxu0 0.0
          %1772 = vmatpush1.msra.mxu0 0.0
          %1773 = vmatprep.subr.mxu0 0.0
          %1774 = vmatpush1.msra.mxu0 0.0
          %1775 = vmatprep.subr.mxu0 0.0
          %1776 = vmatpush1.msra.mxu0 0.0
          %1777 = vmatprep.subr.mxu0 0.0
          %1778 = vmatpush1.msra.mxu0 0.0
          %1779 = vmatprep.subr.mxu0 0.0
          %1780 = vmatpush1.msra.mxu0 0.0
          %1781 = vmatprep.subr.mxu0 0.0
          %1782 = vmatpush1.msra.mxu0 0.0
          %1783 = vmatprep.subr.mxu0 0.0
          %1784 = vmatpush1.msra.mxu0 0.0
          %1785 = vmatprep.subr.mxu0 0.0
          %1786 = vmatpush1.msra.mxu0 0.0
          %1787 = vmatprep.mubr.f32.mxu0 0.0
          %1788 = vmatmul.mubr.f32.gmra.mrb[0].mxu0 %v1721
          %v1789 = vpop.f32.mrb[0].mxu0
          %v1790 = vadd.f32 0.0, %v1789
          %v1791 = vpop.f32.mrb[0].mxu0
          %1792 = vdwg.mxu0
          %v1793 = vld [vmem:[#allocation6] sm:$0xff]
          %v1794 = vld [vmem:[#allocation6 + $0x8] sm:$0xff]
          %v1795 = vld [vmem:[#allocation6 + $0x10] sm:$0xff]
          %v1796 = vld [vmem:[#allocation6 + $0x18] sm:$0xff]
          %1798 = vset.pattern.permute.xlu0 0
          %1799 = vperm.xlu0 %1798, %v1434
          %v1800 = vpop.permute.xlu0 %1799
          %1803 = vset.pattern.permute.xlu0 0
          %1804 = vperm.xlu0 %1803, %v1436
          %v1805 = vpop.permute.xlu0 %1804
          %1808 = vset.pattern.permute.xlu0 0
          %1809 = vperm.xlu0 %1808, %v1438
          %v1810 = vpop.permute.xlu0 %1809
          %1813 = vset.pattern.permute.xlu0 0
          %1814 = vperm.xlu0 %1813, %v1440
          %v1815 = vpop.permute.xlu0 %1814
          %v1817 = vmul.f32 %v1800, %v1793
          %v1818 = vmul.f32 %v1805, %v1794
          %v1819 = vmul.f32 %v1810, %v1795
          %v1820 = vmul.f32 %v1815, %v1796
          %v1821 = vadd.f32 %v1817, %v1571
          %v1822 = vadd.f32 %v1818, %v1644
          %v1823 = vadd.f32 %v1819, %v1717
          %v1824 = vadd.f32 %v1820, %v1790
          %1825 = vst.msk [vmem:[#allocation6] sm:$0xff] %vm1067, %v1821
          %1826 = vst.msk [vmem:[#allocation6 + $0x8] sm:$0xff] %vm1067, %v1822
          %1827 = vst.msk [vmem:[#allocation6 + $0x10] sm:$0xff] %vm1067, %v1823
          %1828 = vst.msk [vmem:[#allocation6 + $0x18] sm:$0xff] %vm1067, %v1824
          %1829 = vst.msk [vmem:[#allocation4] sm:$0xff] %vm1058, %v1425
          %1830 = vst.msk [vmem:[#allocation4 + $0x8] sm:$0xff] %vm1058, %v1426
          %1831 = vst.msk [vmem:[#allocation4 + $0x10] sm:$0xff] %vm1058, %v1427
          %1832 = vst.msk [vmem:[#allocation4 + $0x18] sm:$0xff] %vm1058, %v1428
        $region85: #{tpu_custom_call.1} parent=47 // loop_footer
          %s1076 = sadd.s32 %s1074, 1
        $region86: #{tpu_custom_call.1} parent=47 // loop_footer_branch
          %1073 = sbr.rel target = $region82
        $region87: #{tpu_custom_call.1} parent=47 // loop_exit
          _
        %v1833 = vld [vmem:[#allocation6] sm:$0xff]
        %v1834 = vld [vmem:[#allocation6 + $0x8] sm:$0xff]
        %v1835 = vld [vmem:[#allocation6 + $0x10] sm:$0xff]
        %v1836 = vld [vmem:[#allocation6 + $0x18] sm:$0xff]
        %v1837 = vld [vmem:[#allocation5] sm:$0xff]
        %v1838 = vld [vmem:[#allocation5 + $0x8] sm:$0xff]
        %v1839 = vld [vmem:[#allocation5 + $0x10] sm:$0xff]
        %v1840 = vld [vmem:[#allocation5 + $0x18] sm:$0xff]
        %v1841 = vrcp.pop %v1837
        %v1842 = vrcp.pop %v1838
        %v1843 = vrcp.pop %v1839
        %v1844 = vrcp.pop %v1840
        %1846 = vset.pattern.permute.xlu0 0
        %1847 = vperm.xlu0 %1846, %v1841
        %v1848 = vpop.permute.xlu0 %1847
        %1851 = vset.pattern.permute.xlu0 0
        %1852 = vperm.xlu0 %1851, %v1842
        %v1853 = vpop.permute.xlu0 %1852
        %1856 = vset.pattern.permute.xlu0 0
        %1857 = vperm.xlu0 %1856, %v1843
        %v1858 = vpop.permute.xlu0 %1857
        %1861 = vset.pattern.permute.xlu0 0
        %1862 = vperm.xlu0 %1861, %v1844
        %v1863 = vpop.permute.xlu0 %1862
        %v1865 = vmul.f32 %v1833, %v1848
        %v1866 = vmul.f32 %v1834, %v1853
        %v1867 = vmul.f32 %v1835, %v1858
        %v1868 = vmul.f32 %v1836, %v1863
        %v1869 = vcombine.low %v1865, %v1867
        %v1870 = vcombine.high %v1865, %v1867
        %v1872 = vunpack.c.l.s4 1983009808
        %v1873 = vunpack.c.0.s8 %v1872
        %v1874 = vlaneseq
        %v1875 = vshrl.u32 %v1874, 7
        %v1876 = vsub.s32 %v1873, %v1875
        %v1877 = vrot.slane %v1869, %v1876
        %v1879 = vunpack.c.l.s4 1983009808
        %v1880 = vunpack.c.0.s8 %v1879
        %v1881 = vlaneseq
        %v1882 = vshrl.u32 %v1881, 7
        %v1883 = vsub.s32 %v1880, %v1882
        %v1884 = vrot.slane %v1870, %v1883
        %v1885 = vcombine.low %v1866, %v1868
        %v1886 = vcombine.high %v1866, %v1868
        %v1888 = vunpack.c.l.s4 1983009808
        %v1889 = vunpack.c.0.s8 %v1888
        %v1890 = vlaneseq
        %v1891 = vshrl.u32 %v1890, 7
        %v1892 = vsub.s32 %v1889, %v1891
        %v1893 = vrot.slane %v1885, %v1892
        %v1895 = vunpack.c.l.s4 1983009808
        %v1896 = vunpack.c.0.s8 %v1895
        %v1897 = vlaneseq
        %v1898 = vshrl.u32 %v1897, 7
        %v1899 = vsub.s32 %v1896, %v1898
        %v1900 = vrot.slane %v1886, %v1899
        %v1901 = vcombine.low %v1877, %v1893
        %v1902 = vcombine.high %v1877, %v1893
        %v1904 = vunpack.c.l.s4 1934713408
        %v1905 = vunpack.c.0.s8 %v1904
        %v1906 = vlaneseq
        %v1907 = vshrl.u32 %v1906, 7
        %v1908 = vsub.s32 %v1905, %v1907
        %v1909 = vrot.slane %v1901, %v1908
        %v1911 = vunpack.c.l.s4 1934713408
        %v1912 = vunpack.c.0.s8 %v1911
        %v1913 = vlaneseq
        %v1914 = vshrl.u32 %v1913, 7
        %v1915 = vsub.s32 %v1912, %v1914
        %v1916 = vrot.slane %v1902, %v1915
        %v1917 = vcombine.low %v1884, %v1900
        %v1918 = vcombine.high %v1884, %v1900
        %v1920 = vunpack.c.l.s4 1934713408
        %v1921 = vunpack.c.0.s8 %v1920
        %v1922 = vlaneseq
        %v1923 = vshrl.u32 %v1922, 7
        %v1924 = vsub.s32 %v1921, %v1923
        %v1925 = vrot.slane %v1917, %v1924
        %v1927 = vunpack.c.l.s4 1934713408
        %v1928 = vunpack.c.0.s8 %v1927
        %v1929 = vlaneseq
        %v1930 = vshrl.u32 %v1929, 7
        %v1931 = vsub.s32 %v1928, %v1930
        %v1932 = vrot.slane %v1918, %v1931
        %v1933 = vcombine.high %v1909, 0.0
        %v1934 = vcombine.high %v1916, 0.0
        %v1935 = vcombine.high %v1925, 0.0
        %v1936 = vcombine.high %v1932, 0.0
        %v1937 = vcombine.low %v1909, %v1916
        %v1939 = vunpack.c.l.s4 1983009808
        %v1940 = vunpack.c.0.s8 %v1939
        %v1941 = vlaneseq
        %v1942 = vshrl.u32 %v1941, 7
        %v1943 = vsub.s32 %v1940, %v1942
        %v1944 = vrot.slane %v1937, %v1943
        %v1945 = vcombine.low %v1933, %v1934
        %v1947 = vunpack.c.l.s4 1983009808
        %v1948 = vunpack.c.0.s8 %v1947
        %v1949 = vlaneseq
        %v1950 = vshrl.u32 %v1949, 7
        %v1951 = vsub.s32 %v1948, %v1950
        %v1952 = vrot.slane %v1945, %v1951
        %v1953 = vcombine.low %v1925, %v1932
        %v1955 = vunpack.c.l.s4 1983009808
        %v1956 = vunpack.c.0.s8 %v1955
        %v1957 = vlaneseq
        %v1958 = vshrl.u32 %v1957, 7
        %v1959 = vsub.s32 %v1956, %v1958
        %v1960 = vrot.slane %v1953, %v1959
        %v1961 = vcombine.low %v1935, %v1936
        %v1963 = vunpack.c.l.s4 1983009808
        %v1964 = vunpack.c.0.s8 %v1963
        %v1965 = vlaneseq
        %v1966 = vshrl.u32 %v1965, 7
        %v1967 = vsub.s32 %v1964, %v1966
        %v1968 = vrot.slane %v1961, %v1967
        %v1969 = vcombine.low %v1944, %v1952
        %v1970 = vcombine.high %v1944, %v1952
        %v1972 = vunpack.c.l.s4 1934713408
        %v1973 = vunpack.c.0.s8 %v1972
        %v1974 = vlaneseq
        %v1975 = vshrl.u32 %v1974, 7
        %v1976 = vsub.s32 %v1973, %v1975
        %v1977 = vrot.slane %v1969, %v1976
        %v1979 = vunpack.c.l.s4 1934713408
        %v1980 = vunpack.c.0.s8 %v1979
        %v1981 = vlaneseq
        %v1982 = vshrl.u32 %v1981, 7
        %v1983 = vsub.s32 %v1980, %v1982
        %v1984 = vrot.slane %v1970, %v1983
        %v1985 = vcombine.low %v1960, %v1968
        %v1986 = vcombine.high %v1960, %v1968
        %v1988 = vunpack.c.l.s4 1934713408
        %v1989 = vunpack.c.0.s8 %v1988
        %v1990 = vlaneseq
        %v1991 = vshrl.u32 %v1990, 7
        %v1992 = vsub.s32 %v1989, %v1991
        %v1993 = vrot.slane %v1985, %v1992
        %v1995 = vunpack.c.l.s4 1934713408
        %v1996 = vunpack.c.0.s8 %v1995
        %v1997 = vlaneseq
        %v1998 = vshrl.u32 %v1997, 7
        %v1999 = vsub.s32 %v1996, %v1998
        %v2000 = vrot.slane %v1986, %v1999
        %v2001 = vcombine.low %v1977, %v1993
        %v2002 = vcombine.high %v1977, %v1993
        %v2003 = vcombine.low %v1984, %v2000
        %v2004 = vcombine.high %v1984, %v2000
        %2006 = vrot.lane.b32.xlu0 %v2002, 8
        %v2007 = vpop.permute.xlu0 %2006
        %2010 = vrot.lane.b32.xlu0 %v2003, 16
        %v2011 = vpop.permute.xlu0 %2010
        %2014 = vrot.lane.b32.xlu0 %v2004, 24
        %v2015 = vpop.permute.xlu0 %2014
        %v2017 = vsel %vm1067, %v2001, %v2007
        %vm2018 = vcmask 130048
        %v2019 = vsel %vm2018, %v2017, %v2011
        %vm2020 = vcmask 195584
        %v2021 = vsel %vm2020, %v2019, %v2015
        %v2022 = vld [vmem:[#allocation16] sm:$0xff]
        %v2023 = vld [vmem:[#allocation16 + $0x8] sm:$0xff]
        %v2024 = vld [vmem:[#allocation16 + $0x10] sm:$0xff]
        %v2025 = vld [vmem:[#allocation16 + $0x18] sm:$0xff]
        %v2026 = vld [vmem:[#allocation18] sm:$0x1]
        %v2028 = vlaneseq
        %v2029 = vshrl.u32 %v2028, 7
        %v2030 = vsub.s32 0, %v2029
        %v2031 = vrot.slane %v2026, %v2030
        %v2034 = vsel %vm837, %v2021, 0
        %2036 = vmatprep.subr.mxu0 0.0
        %2037 = vmatpush1.msra.mxu0 %v2022
        %2038 = vmatprep.subr.mxu0 0.0
        %2039 = vmatpush1.msra.mxu0 %v2023
        %2040 = vmatprep.subr.mxu0 0.0
        %2041 = vmatpush1.msra.mxu0 %v2024
        %2042 = vmatprep.subr.mxu0 0.0
        %2043 = vmatpush1.msra.mxu0 %v2025
        %2044 = vmatprep.subr.mxu0 0.0
        %2045 = vmatpush1.msra.mxu0 0.0
        %2046 = vmatprep.subr.mxu0 0.0
        %2047 = vmatpush1.msra.mxu0 0.0
        %2048 = vmatprep.subr.mxu0 0.0
        %2049 = vmatpush1.msra.mxu0 0.0
        %2050 = vmatprep.subr.mxu0 0.0
        %2051 = vmatpush1.msra.mxu0 0.0
        %2052 = vmatprep.subr.mxu0 0.0
        %2053 = vmatpush1.msra.mxu0 0.0
        %2054 = vmatprep.subr.mxu0 0.0
        %2055 = vmatpush1.msra.mxu0 0.0
        %2056 = vmatprep.subr.mxu0 0.0
        %2057 = vmatpush1.msra.mxu0 0.0
        %2058 = vmatprep.subr.mxu0 0.0
        %2059 = vmatpush1.msra.mxu0 0.0
        %2060 = vmatprep.subr.mxu0 0.0
        %2061 = vmatpush1.msra.mxu0 0.0
        %2062 = vmatprep.subr.mxu0 0.0
        %2063 = vmatpush1.msra.mxu0 0.0
        %2064 = vmatprep.subr.mxu0 0.0
        %2065 = vmatpush1.msra.mxu0 0.0
        %2066 = vmatprep.subr.mxu0 0.0
        %2067 = vmatpush1.msra.mxu0 0.0
        %2068 = vmatprep.subr.mxu0 0.0
        %2069 = vmatpush1.msra.mxu0 0.0
        %2070 = vmatprep.subr.mxu0 0.0
        %2071 = vmatpush1.msra.mxu0 0.0
        %2072 = vmatprep.subr.mxu0 0.0
        %2073 = vmatpush1.msra.mxu0 0.0
        %2074 = vmatprep.subr.mxu0 0.0
        %2075 = vmatpush1.msra.mxu0 0.0
        %2076 = vmatprep.subr.mxu0 0.0
        %2077 = vmatpush1.msra.mxu0 0.0
        %2078 = vmatprep.subr.mxu0 0.0
        %2079 = vmatpush1.msra.mxu0 0.0
        %2080 = vmatprep.subr.mxu0 0.0
        %2081 = vmatpush1.msra.mxu0 0.0
        %2082 = vmatprep.subr.mxu0 0.0
        %2083 = vmatpush1.msra.mxu0 0.0
        %2084 = vmatprep.subr.mxu0 0.0
        %2085 = vmatpush1.msra.mxu0 0.0
        %2086 = vmatprep.subr.mxu0 0.0
        %2087 = vmatpush1.msra.mxu0 0.0
        %2088 = vmatprep.subr.mxu0 0.0
        %2089 = vmatpush1.msra.mxu0 0.0
        %2090 = vmatprep.subr.mxu0 0.0
        %2091 = vmatpush1.msra.mxu0 0.0
        %2092 = vmatprep.subr.mxu0 0.0
        %2093 = vmatpush1.msra.mxu0 0.0
        %2094 = vmatprep.subr.mxu0 0.0
        %2095 = vmatpush1.msra.mxu0 0.0
        %2096 = vmatprep.subr.mxu0 0.0
        %2097 = vmatpush1.msra.mxu0 0.0
        %2098 = vmatprep.subr.mxu0 0.0
        %2099 = vmatpush1.msra.mxu0 0.0
        %2100 = vmatprep.mubr.f32.mxu0 0.0
        %2101 = vmatmul.mubr.f32.gmra.mrb[0].mxu0 %v2034
        %v2102 = vpop.f32.mrb[0].mxu0
        %v2103 = vadd.f32 %v2031, %v2102
        %v2104 = vpop.f32.mrb[0].mxu0
        %2105 = vdwg.mxu0
        %2106 = vst.msk [vmem:[%s419] sm:$0xff] %vm837, %v2103
        %s2107 = sand.u32 %s206, 1
        %s2108 = scalar_lea.sflag [#allocation9], %s2107
        %s2109 = sand.u32 %s206, 1
        %s2110 = smul.addr %s2109, 8
        %s2111 = scalar_lea.vmem [#allocation19], %s2110
        %s2112 = sand.u32 %s232, 1
        %s2113 = scalar_lea.sflag [#allocation21], %s2112
        %s2114 = sand.u32 %s232, 1
        %s2115 = smul.addr %s2114, 16
        %s2116 = scalar_lea.vmem [#allocation20], %s2115
        // Predicated region
        $region88: #{tpu_custom_call.1} parent=47 // pred_check
          %p2117 = pneg %p216
        $region89: #{tpu_custom_call.1} parent=47 // pred_check_branch
          %2119 = sbr.rel (%p2117) target = $region91
        $region90: #{tpu_custom_call.1} parent=47 // pred_region
          %s2121 = ssub.s32 128, 128
          %2122 = vsyncadd %s2108, %s2121
          %s2123 = sadd.s32 %s37, %s36
          %s2124 = smul.addr %s2123, 128
          %s2125 = scalar_lea.hbm %s7, %s2124
          %s2127 = sshll.u32 %s2111, 4
          %s2128 = int_to_ptr.vmem [resolvable:$true] %s2127
          %2130 = dma.vmem_to_hbm [thread:$0]  %s2128, 128, %s2125, %s2108
        $region91: #{tpu_custom_call.1} parent=47 // pred_fallthru
          _
        // Predicated region
        $region92: #{tpu_custom_call.1} parent=47 // pred_check
          %p2131 = pneg %p242
        $region93: #{tpu_custom_call.1} parent=47 // pred_check_branch
          %2133 = sbr.rel (%p2131) target = $region95
        $region94: #{tpu_custom_call.1} parent=47 // pred_region
          %s2135 = ssub.s32 256, 256
          %2136 = vsyncadd %s2113, %s2135
          %s2137 = smul.addr %s36, 2
          %s2138 = smul.addr %s2137, 128
          %s2139 = scalar_lea.hbm %s8, %s2138
          %s2140 = sshll.u32 %s2116, 4
          %s2141 = int_to_ptr.vmem [resolvable:$true] %s2140
          %2146 = dma.vmem_to_hbm [thread:$0]  %s2141, 256, %s2139, %s2113, 128, 128, 8
        $region95: #{tpu_custom_call.1} parent=47 // pred_fallthru
          _
      $region48: #{tpu_custom_call.1} parent=5 // pred_fallthru
        _
      %p2147 = scmp.le.s32.totalorder 2, %s27
      // Predicated region
      $region96: #{tpu_custom_call.1} parent=5 // pred_check
        %p2148 = pneg %p2147
      $region97: #{tpu_custom_call.1} parent=5 // pred_check_branch
        %2150 = sbr.rel (%p2148) target = $region99
      $region98: #{tpu_custom_call.1} parent=5 // pred_region
        %s2151 = ssub.s32 %s27, 2
        // Predicated region
        $region100: #{tpu_custom_call.1} parent=98 // pred_check
          %p2152 = pneg %p222
        $region101: #{tpu_custom_call.1} parent=98 // pred_check_branch
          %2154 = sbr.rel (%p2152) target = $region103
        $region102: #{tpu_custom_call.1} parent=98 // pred_region
          %s2155 = sand.u32 %s207, 1
          %s2156 = scalar_lea.sflag [#allocation9], %s2155
          %s2157 = sand.u32 %s207, 1
          %s2158 = smul.addr %s2157, 8
          %s2159 = scalar_lea.vmem [#allocation19], %s2158
          %2160 = dma.done %s2156, 128
        $region103: #{tpu_custom_call.1} parent=98 // pred_fallthru
          _
        // Predicated region
        $region104: #{tpu_custom_call.1} parent=98 // pred_check
          %p2161 = pneg %p248
        $region105: #{tpu_custom_call.1} parent=98 // pred_check_branch
          %2163 = sbr.rel (%p2161) target = $region107
        $region106: #{tpu_custom_call.1} parent=98 // pred_region
          %s2164 = sand.u32 %s233, 1
          %s2165 = scalar_lea.sflag [#allocation21], %s2164
          %s2166 = sand.u32 %s233, 1
          %s2167 = smul.addr %s2166, 16
          %s2168 = scalar_lea.vmem [#allocation20], %s2167
          %2169 = dma.done %s2165, 256
        $region107: #{tpu_custom_call.1} parent=98 // pred_fallthru
          _
      $region99: #{tpu_custom_call.1} parent=5 // pred_fallthru
        _
    $region6: #{tpu_custom_call.1} parent=1 // loop_footer
      %s31 = sadd.s32 1, %s27
    $region7: #{tpu_custom_call.1} parent=1 // loop_footer_branch
      %26 = sbr.rel target = $region3
    $region8: #{tpu_custom_call.1} parent=1 // loop_exit
      _
    %2170 = vsyncpa [#allocation8], 1
    %s2171 = scalar_lea.sflag [#allocation8], 1
    %2172 = vsyncpa %s2171, 1
    %2173 = vsyncpa [#allocation11], 1
    %2174 = vsyncpa [#allocation14], 1
    %2175 = vsyncpa [#allocation17], 1
    %2176 = vsyncpa [#allocation9], 1
    %s2177 = scalar_lea.sflag [#allocation9], 1
    %2178 = vsyncpa %s2177, 1
    %2179 = vsyncpa [#allocation21], 1
    %s2180 = scalar_lea.sflag [#allocation21], 1
    %2181 = vsyncpa %s2180, 1

</llo_original>
